<compile_context>
chip_gen: v7x
topology: tpu7x:2x2x1
jax: 0.10.0
libtpu: 0.0.40
codegen_flags: <defaults>
</compile_context>

<pallas_src>
import functools

import jax
import jax.numpy as jnp
from jax import lax
from jax.experimental import pallas as pl
from jax.experimental.pallas import tpu as pltpu


def _round_up(x, m):
    return ((x + m - 1) // m) * m


# ---------------------------------------------------------------------------
# Kernel 1: LSTM recurrence. grid = (batch blocks [parallel], time chunks [arbitrary])
# ---------------------------------------------------------------------------
def lstm_kernel(x_ref, wih_ref, whh_ref, b_ref, h_out_ref,
                zx_sc, h_sc, c_sc, *, seq_len, t_chunk, unroll):
    """x_ref:     (TT*BB, Ep) bf16  time-major chunk (row = t*BB + b), batch-block major overall
       wih_ref:   (Ep, 4*Hp)  bf16  gate-blocked, lane aligned, single-buffered
       whh_ref:   (Hp, 4*Hp)  bf16  single-buffered
       b_ref:     (1, 4*Hp)   f32   b_ih + b_hh
       h_out_ref: (BB, Hp)    f32   final hidden state of this batch block
       zx_sc:     (TT*BB, 4*Hp) f32 hoisted input projection of the chunk
       h_sc/c_sc: (BB, Hp)    f32   state carried across time chunks
    """
    t_idx = pl.program_id(1)
    BB, Hp = h_sc.shape
    TT = t_chunk

    @pl.when(t_idx == 0)
    def _():
        h_sc[...] = jnp.zeros_like(h_sc)
        c_sc[...] = jnp.zeros_like(c_sc)

    # Hoisted input projection: one big (TT*BB, Ep) x (Ep, 4*Hp) bf16 MXU matmul
    # per chunk, bias folded in once (not per timestep).
    zx_sc[...] = (jnp.dot(x_ref[...], wih_ref[...],
                          preferred_element_type=jnp.float32) + b_ref[...])

    mask_tail = (seq_len % TT) != 0          # static python bool
    t_base = t_idx * TT

    def step(t, carry):
        h, c = carry                         # carried in vregs within the chunk
        row = pl.multiple_of(t * BB, BB)
        z = zx_sc[pl.ds(row, BB), :] + jnp.dot(
            h.astype(jnp.bfloat16), whh_ref[...],
            preferred_element_type=jnp.float32)             # (BB, 4*Hp)
        # Lane-aligned gate slices (Hp is a multiple of 128) -> free views.
        i_g = jax.nn.sigmoid(z[:, 0 * Hp:1 * Hp])
        f_g = jax.nn.sigmoid(z[:, 1 * Hp:2 * Hp])
        g_g = jnp.tanh(z[:, 2 * Hp:3 * Hp])
        o_g = jax.nn.sigmoid(z[:, 3 * Hp:4 * Hp])
        c_new = f_g * c + i_g * g_g
        h_new = o_g * jnp.tanh(c_new)
        if mask_tail:                        # only emitted when T % TT != 0
            valid = (t_base + t) < seq_len
            h_new = jnp.where(valid, h_new, h)
            c_new = jnp.where(valid, c_new, c)
        return h_new, c_new

    h, c = lax.fori_loop(0, TT, step, (h_sc[...], c_sc[...]), unroll=unroll)

    # Spill state once per chunk (not once per timestep).
    h_sc[...] = h
    c_sc[...] = c

    @pl.when(t_idx == pl.num_programs(1) - 1)
    def _():
        h_out_ref[...] = h.astype(h_out_ref.dtype)


# ---------------------------------------------------------------------------
# Kernel 2: final Linear on the last hidden state, tiled over the vocab axis.
# ---------------------------------------------------------------------------
def fc_kernel(h_ref, fcw_ref, fcb_ref, out_ref):
    out_ref[...] = (jnp.dot(h_ref[...].astype(jnp.bfloat16), fcw_ref[...],
                            preferred_element_type=jnp.float32)
                    + fcb_ref[...]).astype(out_ref.dtype)


# ---------------------------------------------------------------------------
# Wrapper
# ---------------------------------------------------------------------------
def qa_model_forward(tokens, params, *, t_chunk=None, v_chunk=512,
                     vmem_budget_bytes=48 * 1024 * 1024):
    """tokens: (B, T) int32; returns (B, vocab_size) f32 logits."""
    emb = params["embedding"]          # (V, E)
    w_ih = params["w_ih"]              # (E, 4H)  gate order i,f,g,o
    w_hh = params["w_hh"]              # (H, 4H)
    b = params["b"]                    # (1, 4H)  b_ih + b_hh
    fc_w = params["fc_w"]              # (H, V)
    fc_b = params["fc_b"]              # (1, V)

    B, T = tokens.shape
    V, E = emb.shape
    H = w_hh.shape[0]

    f32, bf16 = jnp.float32, jnp.bfloat16

    # ---- padded / blocked sizes ---------------------------------------------
    Ep = _round_up(E, 128)             # lane-aligned input features
    Hp = _round_up(H, 128)             # lane-aligned gate blocks
    # Batch blocks: 16-sublane aligned (bf16 packing). Large batches are split
    # into 128-row blocks so the "parallel" batch axis can use v7x's second TC.
    BB = 128 if _round_up(B, 16) > 256 else _round_up(B, 16)
    Bp = _round_up(B, BB)
    n_bb = Bp // BB

    # ---- time-chunk size from a VMEM budget (64 MiB-safe default for v7x) ----
    fixed = (Ep * 4 * Hp * 2           # w_ih  (bf16, single buffer)
             + Hp * 4 * Hp * 2         # w_hh  (bf16, single buffer)
             + 4 * Hp * 4              # bias
             + 2 * BB * Hp * 4         # h_sc + c_sc
             + 2 * BB * Hp * 4)        # h_out (double buffered)
    per_t = (BB * 4 * Hp * 4           # zx_sc rows (f32)
             + 2 * BB * Ep * 2)        # x chunk rows (bf16, double buffered)
    if t_chunk is None:
        t_chunk = max(1, (vmem_budget_bytes - fixed) // max(per_t, 1))
        t_chunk = min(int(t_chunk), 64)
    TT = max(1, min(int(t_chunk), T))
    n_tc = -(-T // TT)                 # T does NOT need to divide: tail is masked
    T_pad = n_tc * TT

    # Partial unroll once the per-step gate tensor outgrows ~16 vregs.
    unroll = True if (BB * 4 * Hp * 4) <= 64 * 1024 else 4

    # ---- weights: gate-blocked, lane aligned, zero padded, bf16 for the MXU --
    def pad_gates(w, rows, rows_p, dtype):      # (rows,4H) -> (rows_p, 4*Hp)
        w4 = w.reshape(rows, 4, H)
        out = jnp.zeros((rows_p, 4, Hp), f32).at[:rows, :, :H].set(w4)
        return out.reshape(rows_p, 4 * Hp).astype(dtype)

    wih_p = pad_gates(w_ih, E, Ep, bf16)
    whh_p = pad_gates(w_hh, H, Hp, bf16)
    b_p = pad_gates(b, 1, 1, f32)

    v_chunk = _round_up(max(int(v_chunk), 128), 128)
    v_chunk_eff = min(v_chunk, _round_up(V, 128))
    Vp = _round_up(V, v_chunk_eff)
    fcw_p = jnp.zeros((Hp, Vp), f32).at[:H, :V].set(fc_w).astype(bf16)
    fcb_p = jnp.zeros((1, Vp), f32).at[:, :V].set(fc_b)

    # ---- embedding gather directly in the kernel layout (no jnp.pad pass) ----
    # One extra zero row (index V) absorbs batch padding and tail timesteps.
    emb_p = jnp.zeros((V + 1, Ep), bf16).at[:V, :E].set(emb.astype(bf16))
    tok = jnp.full((T_pad, Bp), V, dtype=jnp.int32).at[:T, :B].set(tokens.T)
    tok = tok.reshape(T_pad, n_bb, BB).transpose(1, 0, 2)        # (n_bb, T_pad, BB)
    x = jnp.take(emb_p, tok, axis=0).reshape(n_bb * T_pad * BB, Ep)   # bf16

    # ---- LSTM pallas_call -----------------------------------------------------
    lstm_vmem = fixed + TT * per_t + TT * BB * Ep * 2
    lstm_vmem = min(128 * 1024 * 1024,
                    max(32 * 1024 * 1024, (lstm_vmem * 3) // 2 + 2 * 1024 * 1024))

    lstm = functools.partial(lstm_kernel, seq_len=T, t_chunk=TT, unroll=unroll)

    h_final = pl.pallas_call(
        lstm,
        out_shape=jax.ShapeDtypeStruct((Bp, Hp), f32),
        grid=(n_bb, n_tc),
        in_specs=[
            # streamed x chunks (batch-block major, then time chunks)
            pl.BlockSpec((TT * BB, Ep), lambda bb, i: (bb * n_tc + i, 0)),
            # resident weights: single-buffered (constant index map)
            pl.BlockSpec((Ep, 4 * Hp), lambda bb, i: (0, 0),
                         pipeline_mode=pl.Buffered(1)),
            pl.BlockSpec((Hp, 4 * Hp), lambda bb, i: (0, 0),
                         pipeline_mode=pl.Buffered(1)),
            pl.BlockSpec((1, 4 * Hp), lambda bb, i: (0, 0),
                         pipeline_mode=pl.Buffered(1)),
        ],
        out_specs=pl.BlockSpec((BB, Hp), lambda bb, i: (bb, 0)),
        scratch_shapes=[
            pltpu.VMEM((TT * BB, 4 * Hp), f32),      # hoisted x-projection
            pltpu.VMEM((BB, Hp), f32),               # h carried across chunks
            pltpu.VMEM((BB, Hp), f32),               # c carried across chunks
        ],
        compiler_params=pltpu.CompilerParams(
            dimension_semantics=("parallel", "arbitrary"),
            vmem_limit_bytes=int(lstm_vmem)),
    )(x, wih_p, whh_p, b_p)

    # ---- FC pallas_call (vocab-tiled, lane-dense output) ----------------------
    n_vc = Vp // v_chunk_eff
    fc_vmem = (Bp * Hp * 4                     # h resident (single buffer)
               + 2 * Hp * v_chunk_eff * 2      # fc_w tiles (bf16, double buffered)
               + 2 * v_chunk_eff * 4           # fc_b tiles
               + 2 * Bp * v_chunk_eff * 4)     # out tiles
    fc_vmem = min(128 * 1024 * 1024,
                  max(32 * 1024 * 1024, (fc_vmem * 3) // 2 + 2 * 1024 * 1024))

    out_p = pl.pallas_call(
        fc_kernel,
        out_shape=jax.ShapeDtypeStruct((Bp, Vp), f32),
        grid=(n_vc,),
        in_specs=[
            pl.BlockSpec((Bp, Hp), lambda j: (0, 0),
                         pipeline_mode=pl.Buffered(1)),
            pl.BlockSpec((Hp, v_chunk_eff), lambda j: (0, j)),
            pl.BlockSpec((1, v_chunk_eff), lambda j: (0, j)),
        ],
        out_specs=pl.BlockSpec((Bp, v_chunk_eff), lambda j: (0, j)),
        compiler_params=pltpu.CompilerParams(
            dimension_semantics=("parallel",),
            vmem_limit_bytes=int(fc_vmem)),
    )(h_final, fcw_p, fcb_p)

    return out_p[:B, :V]


# ---------------------------------------------------------------------------
# Parameter init + pure-JAX f32 reference (for the self-check)
# ---------------------------------------------------------------------------
def init_params(key, vocab_size, embedding_dim, hidden_dim):
    ks = jax.random.split(key, 7)
    scale = 0.1
    w_ih = scale * jax.random.normal(ks[0], (embedding_dim, 4 * hidden_dim), jnp.float32)
    w_hh = scale * jax.random.normal(ks[1], (hidden_dim, 4 * hidden_dim), jnp.float32)
    b_ih = scale * jax.random.normal(ks[2], (4 * hidden_dim,), jnp.float32)
    b_hh = scale * jax.random.normal(ks[3], (4 * hidden_dim,), jnp.float32)
    return {
        "embedding": scale * jax.random.normal(ks[4], (vocab_size, embedding_dim), jnp.float32),
        "w_ih": w_ih,
        "w_hh": w_hh,
        "b": (b_ih + b_hh)[None, :],
        "fc_w": scale * jax.random.normal(ks[5], (hidden_dim, vocab_size), jnp.float32),
        "fc_b": scale * jax.random.normal(ks[6], (vocab_size,), jnp.float32)[None, :],
    }


def reference_forward(tokens, params):
    emb = jnp.take(params["embedding"], tokens, axis=0)     # (B, T, E)
    B, T, E = emb.shape
    H = params["w_hh"].shape[0]
    h = jnp.zeros((B, H), jnp.float32)
    c = jnp.zeros((B, H), jnp.float32)
    for t in range(T):
        z = emb[:, t, :] @ params["w_ih"] + h @ params["w_hh"] + params["b"]
        i = jax.nn.sigmoid(z[:, 0 * H:1 * H])
        f = jax.nn.sigmoid(z[:, 1 * H:2 * H])
        g = jnp.tanh(z[:, 2 * H:3 * H])
        o = jax.nn.sigmoid(z[:, 3 * H:4 * H])
        c = f * c + i * g
        h = o * jnp.tanh(c)
    return h @ params["fc_w"] + params["fc_b"]


if __name__ == "__main__":
    vocab_size, embedding_dim, hidden_dim = 256, 32, 32
    B, T = 2, 8

    key = jax.random.PRNGKey(0)
    k_tok, k_par = jax.random.split(key)
    tokens = jax.random.randint(k_tok, (B, T), 0, vocab_size, dtype=jnp.int32)
    params = init_params(k_par, vocab_size, embedding_dim, hidden_dim)

    ref = reference_forward(tokens, params)

    # bf16 MXU path -> loosened tolerance vs. the f32 reference.
    atol = rtol = 2e-2

    # Path 1: T not divisible by the chunk -> exercises chunked carry + tail mask.
    fwd_masked = jax.jit(functools.partial(qa_model_forward, t_chunk=3))
    out1 = jax.block_until_ready(fwd_masked(tokens, params))
    assert out1.shape == (B, vocab_size)
    assert jnp.allclose(out1, ref, atol=atol, rtol=rtol), \
        float(jnp.max(jnp.abs(out1 - ref)))

    # Path 2: default VMEM-budgeted chunk (single chunk here, no masking).
    fwd_default = jax.jit(qa_model_forward)
    out2 = jax.block_until_ready(fwd_default(tokens, params))
    assert out2.shape == (B, vocab_size)
    assert jnp.allclose(out2, ref, atol=atol, rtol=rtol), \
        float(jnp.max(jnp.abs(out2 - ref)))

    print("KERNEL_OK")
</pallas_src>

<mosaic_0001>
module attributes {stable_mosaic.version = 11 : i64} {
  func.func @fc_kernel(%arg0: i32, %arg1: memref<16x128xf32, #tpu.memory_space<vmem>>, %arg2: memref<128x256xbf16, #tpu.memory_space<vmem>>, %arg3: memref<1x256xf32, #tpu.memory_space<vmem>>, %arg4: memref<16x256xf32, #tpu.memory_space<vmem>>) attributes {dimension_semantics = [#tpu.dimension_semantics<parallel>], iteration_bounds = array<i64: 1>, scalar_prefetch = 0 : i64, scratch_operands = 0 : i64, tpu.core_type = #tpu.core_type<tc>, window_params = [{pipeline_mode = #tpu.pipeline_mode<synchronous>, transform_indices = @transform_0, window_bounds = array<i64: 16, 128>}, {transform_indices = @transform_1, window_bounds = array<i64: 128, 256>}, {transform_indices = @transform_2, window_bounds = array<i64: 1, 256>}, {transform_indices = @transform_3, window_bounds = array<i64: 16, 256>}]} {
    %c0 = arith.constant 0 : index
    %c0_0 = arith.constant 0 : index
    %0 = vector.load %arg1[%c0, %c0_0] : memref<16x128xf32, #tpu.memory_space<vmem>>, vector<16x128xf32>
    %1 = arith.truncf %0 : vector<16x128xf32> to vector<16x128xbf16>
    %c0_1 = arith.constant 0 : index
    %c0_2 = arith.constant 0 : index
    %2 = vector.load %arg2[%c0_1, %c0_2] : memref<128x256xbf16, #tpu.memory_space<vmem>>, vector<128x256xbf16>
    %cst = arith.constant dense<0.000000e+00> : vector<16x256xf32>
    %3 = tpu.matmul %1, %2, %cst {dimension_numbers = #tpu.dot_dimension_numbers<[1], [0], [0], [1], [0, 0, 1, 1], [], []>} : vector<16x128xbf16>, vector<128x256xbf16>, vector<16x256xf32> -> vector<16x256xf32>
    %c0_3 = arith.constant 0 : index
    %c0_4 = arith.constant 0 : index
    %4 = vector.load %arg3[%c0_3, %c0_4] : memref<1x256xf32, #tpu.memory_space<vmem>>, vector<1x256xf32>
    %5 = vector.broadcast %4 : vector<1x256xf32> to vector<16x256xf32>
    %6 = arith.addf %3, %5 : vector<16x256xf32>
    %c0_5 = arith.constant 0 : index
    %c0_6 = arith.constant 0 : index
    %7 = vector.load %arg4[%c0_5, %c0_6] : memref<16x256xf32, #tpu.memory_space<vmem>>, vector<16x256xf32>
    tpu.vector_store %arg4[%c0_5, %c0_6], %6 {strides = array<i32>} : memref<16x256xf32, #tpu.memory_space<vmem>>, vector<16x256xf32>,
    return
  }
  func.func @transform_0(%arg0: i32) -> (i32, i32) {
    %c0_i32 = arith.constant 0 : i32
    %c0_i32_0 = arith.constant 0 : i32
    %c0_i32_1 = arith.constant 0 : i32
    return %c0_i32, %c0_i32_0 : i32, i32
  }
  func.func @transform_1(%arg0: i32) -> (i32, i32) {
    %c0_i32 = arith.constant 0 : i32
    %c0_i32_0 = arith.constant 0 : i32
    return %c0_i32, %arg0 : i32, i32
  }
  func.func @transform_2(%arg0: i32) -> (i32, i32) {
    %c0_i32 = arith.constant 0 : i32
    %c0_i32_0 = arith.constant 0 : i32
    return %c0_i32, %arg0 : i32, i32
  }
  func.func @transform_3(%arg0: i32) -> (i32, i32) {
    %c0_i32 = arith.constant 0 : i32
    %c0_i32_0 = arith.constant 0 : i32
    return %c0_i32, %arg0 : i32, i32
  }
}

module attributes {stable_mosaic.version = 11 : i64} {
  func.func @lstm_kernel(%arg0: i32, %arg1: i32, %arg2: memref<48x128xbf16, #tpu.memory_space<vmem>>, %arg3: memref<128x512xbf16, #tpu.memory_space<vmem>>, %arg4: memref<128x512xbf16, #tpu.memory_space<vmem>>, %arg5: memref<1x512xf32, #tpu.memory_space<vmem>>, %arg6: memref<16x128xf32, #tpu.memory_space<vmem>>, %arg7: memref<48x512xf32, #tpu.memory_space<vmem>>, %arg8: memref<16x128xf32, #tpu.memory_space<vmem>>, %arg9: memref<16x128xf32, #tpu.memory_space<vmem>>) attributes {dimension_semantics = [#tpu.dimension_semantics<parallel>, #tpu.dimension_semantics<arbitrary>], iteration_bounds = array<i64: 1, 3>, scalar_prefetch = 0 : i64, scratch_operands = 3 : i64, tpu.core_type = #tpu.core_type<tc>, window_params = [{transform_indices = @transform_0, window_bounds = array<i64: 48, 128>}, {pipeline_mode = #tpu.pipeline_mode<synchronous>, transform_indices = @transform_1, window_bounds = array<i64: 128, 512>}, {pipeline_mode = #tpu.pipeline_mode<synchronous>, transform_indices = @transform_2, window_bounds = array<i64: 128, 512>}, {pipeline_mode = #tpu.pipeline_mode<synchronous>, transform_indices = @transform_3, window_bounds = array<i64: 1, 512>}, {transform_indices = @transform_4, window_bounds = array<i64: 16, 128>}]} {
    %c0_i32 = arith.constant 0 : i32
    %0 = arith.cmpi eq, %arg1, %c0_i32 : i32
    %1 = arith.extui %0 : i1 to i32
    %c0_i32_0 = arith.constant 0 : i32
    %2 = arith.cmpi ne, %1, %c0_i32_0 : i32
    scf.if %2 {
      %cst_45 = arith.constant 0.000000e+00 : f32
      %129 = vector.broadcast %cst_45 : f32 to vector<16x128xf32>
      %c0_46 = arith.constant 0 : index
      %c0_47 = arith.constant 0 : index
      %130 = vector.load %arg8[%c0_46, %c0_47] : memref<16x128xf32, #tpu.memory_space<vmem>>, vector<16x128xf32>
      tpu.vector_store %arg8[%c0_46, %c0_47], %129 {strides = array<i32>} : memref<16x128xf32, #tpu.memory_space<vmem>>, vector<16x128xf32>,
      %cst_48 = arith.constant 0.000000e+00 : f32
      %131 = vector.broadcast %cst_48 : f32 to vector<16x128xf32>
      %c0_49 = arith.constant 0 : index
      %c0_50 = arith.constant 0 : index
      %132 = vector.load %arg9[%c0_49, %c0_50] : memref<16x128xf32, #tpu.memory_space<vmem>>, vector<16x128xf32>
      tpu.vector_store %arg9[%c0_49, %c0_50], %131 {strides = array<i32>} : memref<16x128xf32, #tpu.memory_space<vmem>>, vector<16x128xf32>,
    } else {
    }
    %c0 = arith.constant 0 : index
    %c0_1 = arith.constant 0 : index
    %3 = vector.load %arg2[%c0, %c0_1] : memref<48x128xbf16, #tpu.memory_space<vmem>>, vector<48x128xbf16>
    %c0_2 = arith.constant 0 : index
    %c0_3 = arith.constant 0 : index
    %4 = vector.load %arg3[%c0_2, %c0_3] : memref<128x512xbf16, #tpu.memory_space<vmem>>, vector<128x512xbf16>
    %cst = arith.constant dense<0.000000e+00> : vector<48x512xf32>
    %5 = tpu.matmul %3, %4, %cst {dimension_numbers = #tpu.dot_dimension_numbers<[1], [0], [0], [1], [0, 0, 1, 1], [], []>} : vector<48x128xbf16>, vector<128x512xbf16>, vector<48x512xf32> -> vector<48x512xf32>
    %c0_4 = arith.constant 0 : index
    %c0_5 = arith.constant 0 : index
    %6 = vector.load %arg5[%c0_4, %c0_5] : memref<1x512xf32, #tpu.memory_space<vmem>>, vector<1x512xf32>
    %7 = vector.broadcast %6 : vector<1x512xf32> to vector<48x512xf32>
    %8 = arith.addf %5, %7 : vector<48x512xf32>
    %c0_6 = arith.constant 0 : index
    %c0_7 = arith.constant 0 : index
    %9 = vector.load %arg7[%c0_6, %c0_7] : memref<48x512xf32, #tpu.memory_space<vmem>>, vector<48x512xf32>
    tpu.vector_store %arg7[%c0_6, %c0_7], %8 {strides = array<i32>} : memref<48x512xf32, #tpu.memory_space<vmem>>, vector<48x512xf32>,
    %c3_i32 = arith.constant 3 : i32
    %10 = arith.muli %arg1, %c3_i32 : i32
    %c0_8 = arith.constant 0 : index
    %c0_9 = arith.constant 0 : index
    %11 = vector.load %arg8[%c0_8, %c0_9] : memref<16x128xf32, #tpu.memory_space<vmem>>, vector<16x128xf32>
    %c0_10 = arith.constant 0 : index
    %c0_11 = arith.constant 0 : index
    %12 = vector.load %arg9[%c0_10, %c0_11] : memref<16x128xf32, #tpu.memory_space<vmem>>, vector<16x128xf32>
    %c0_i32_12 = arith.constant 0 : i32
    %c16_i32 = arith.constant 16 : i32
    %13 = arith.muli %c0_i32_12, %c16_i32 : i32
    %14 = tpu.assume_multiple %13, 16 : i32
    %15 = arith.index_cast %14 : i32 to index
    %c0_13 = arith.constant 0 : index
    %16 = vector.load %arg7[%15, %c0_13] : memref<48x512xf32, #tpu.memory_space<vmem>>, vector<16x512xf32>
    %17 = arith.truncf %11 : vector<16x128xf32> to vector<16x128xbf16>
    %c0_14 = arith.constant 0 : index
    %c0_15 = arith.constant 0 : index
    %18 = vector.load %arg4[%c0_14, %c0_15] : memref<128x512xbf16, #tpu.memory_space<vmem>>, vector<128x512xbf16>
    %cst_16 = arith.constant dense<0.000000e+00> : vector<16x512xf32>
    %19 = tpu.matmul %17, %18, %cst_16 {dimension_numbers = #tpu.dot_dimension_numbers<[1], [0], [0], [1], [0, 0, 1, 1], [], []>} : vector<16x128xbf16>, vector<128x512xbf16>, vector<16x512xf32> -> vector<16x512xf32>
    %20 = arith.addf %16, %19 : vector<16x512xf32>
    %21 = vector.extract_strided_slice %20 {offsets = [0, 0], sizes = [16, 128], strides = [1, 1]} : vector<16x512xf32> to vector<16x128xf32>
    %22 = arith.negf %21 : vector<16x128xf32>
    %23 = math.exp %22 : vector<16x128xf32>
    %cst_17 = arith.constant 1.000000e+00 : f32
    %24 = vector.broadcast %cst_17 : f32 to vector<16x128xf32>
    %25 = arith.addf %24, %23 : vector<16x128xf32>
    %26 = arith.divf %24, %25 : vector<16x128xf32>
    %27 = vector.extract_strided_slice %20 {offsets = [0, 128], sizes = [16, 128], strides = [1, 1]} : vector<16x512xf32> to vector<16x128xf32>
    %28 = arith.negf %27 : vector<16x128xf32>
    %29 = math.exp %28 : vector<16x128xf32>
    %cst_18 = arith.constant 1.000000e+00 : f32
    %30 = vector.broadcast %cst_18 : f32 to vector<16x128xf32>
    %31 = arith.addf %30, %29 : vector<16x128xf32>
    %32 = arith.divf %30, %31 : vector<16x128xf32>
    %33 = vector.extract_strided_slice %20 {offsets = [0, 256], sizes = [16, 128], strides = [1, 1]} : vector<16x512xf32> to vector<16x128xf32>
    %34 = math.tanh %33 : vector<16x128xf32>
    %35 = vector.extract_strided_slice %20 {offsets = [0, 384], sizes = [16, 128], strides = [1, 1]} : vector<16x512xf32> to vector<16x128xf32>
    %36 = arith.negf %35 : vector<16x128xf32>
    %37 = math.exp %36 : vector<16x128xf32>
    %cst_19 = arith.constant 1.000000e+00 : f32
    %38 = vector.broadcast %cst_19 : f32 to vector<16x128xf32>
    %39 = arith.addf %38, %37 : vector<16x128xf32>
    %40 = arith.divf %38, %39 : vector<16x128xf32>
    %41 = arith.mulf %32, %12 : vector<16x128xf32>
    %42 = arith.mulf %26, %34 : vector<16x128xf32>
    %43 = arith.addf %41, %42 : vector<16x128xf32>
    %44 = math.tanh %43 : vector<16x128xf32>
    %45 = arith.mulf %40, %44 : vector<16x128xf32>
    %46 = arith.addi %10, %c0_i32_12 : i32
    %c8_i32 = arith.constant 8 : i32
    %47 = arith.cmpi slt, %46, %c8_i32 : i32
    %48 = arith.select %47, %45, %11 : vector<16x128xf32>
    %49 = arith.select %47, %43, %12 : vector<16x128xf32>
    %c1_i32 = arith.constant 1 : i32
    %c16_i32_20 = arith.constant 16 : i32
    %50 = arith.muli %c1_i32, %c16_i32_20 : i32
    %51 = tpu.assume_multiple %50, 16 : i32
    %52 = arith.index_cast %51 : i32 to index
    %c0_21 = arith.constant 0 : index
    %53 = vector.load %arg7[%52, %c0_21] : memref<48x512xf32, #tpu.memory_space<vmem>>, vector<16x512xf32>
    %54 = arith.truncf %48 : vector<16x128xf32> to vector<16x128xbf16>
    %c0_22 = arith.constant 0 : index
    %c0_23 = arith.constant 0 : index
    %55 = vector.load %arg4[%c0_22, %c0_23] : memref<128x512xbf16, #tpu.memory_space<vmem>>, vector<128x512xbf16>
    %cst_24 = arith.constant dense<0.000000e+00> : vector<16x512xf32>
    %56 = tpu.matmul %54, %55, %cst_24 {dimension_numbers = #tpu.dot_dimension_numbers<[1], [0], [0], [1], [0, 0, 1, 1], [], []>} : vector<16x128xbf16>, vector<128x512xbf16>, vector<16x512xf32> -> vector<16x512xf32>
    %57 = arith.addf %53, %56 : vector<16x512xf32>
    %58 = vector.extract_strided_slice %57 {offsets = [0, 0], sizes = [16, 128], strides = [1, 1]} : vector<16x512xf32> to vector<16x128xf32>
    %59 = arith.negf %58 : vector<16x128xf32>
    %60 = math.exp %59 : vector<16x128xf32>
    %cst_25 = arith.constant 1.000000e+00 : f32
    %61 = vector.broadcast %cst_25 : f32 to vector<16x128xf32>
    %62 = arith.addf %61, %60 : vector<16x128xf32>
    %63 = arith.divf %61, %62 : vector<16x128xf32>
    %64 = vector.extract_strided_slice %57 {offsets = [0, 128], sizes = [16, 128], strides = [1, 1]} : vector<16x512xf32> to vector<16x128xf32>
    %65 = arith.negf %64 : vector<16x128xf32>
    %66 = math.exp %65 : vector<16x128xf32>
    %cst_26 = arith.constant 1.000000e+00 : f32
    %67 = vector.broadcast %cst_26 : f32 to vector<16x128xf32>
    %68 = arith.addf %67, %66 : vector<16x128xf32>
    %69 = arith.divf %67, %68 : vector<16x128xf32>
    %70 = vector.extract_strided_slice %57 {offsets = [0, 256], sizes = [16, 128], strides = [1, 1]} : vector<16x512xf32> to vector<16x128xf32>
    %71 = math.tanh %70 : vector<16x128xf32>
    %72 = vector.extract_strided_slice %57 {offsets = [0, 384], sizes = [16, 128], strides = [1, 1]} : vector<16x512xf32> to vector<16x128xf32>
    %73 = arith.negf %72 : vector<16x128xf32>
    %74 = math.exp %73 : vector<16x128xf32>
    %cst_27 = arith.constant 1.000000e+00 : f32
    %75 = vector.broadcast %cst_27 : f32 to vector<16x128xf32>
    %76 = arith.addf %75, %74 : vector<16x128xf32>
    %77 = arith.divf %75, %76 : vector<16x128xf32>
    %78 = arith.mulf %69, %49 : vector<16x128xf32>
    %79 = arith.mulf %63, %71 : vector<16x128xf32>
    %80 = arith.addf %78, %79 : vector<16x128xf32>
    %81 = math.tanh %80 : vector<16x128xf32>
    %82 = arith.mulf %77, %81 : vector<16x128xf32>
    %83 = arith.addi %10, %c1_i32 : i32
    %c8_i32_28 = arith.constant 8 : i32
    %84 = arith.cmpi slt, %83, %c8_i32_28 : i32
    %85 = arith.select %84, %82, %48 : vector<16x128xf32>
    %86 = arith.select %84, %80, %49 : vector<16x128xf32>
    %c2_i32 = arith.constant 2 : i32
    %c16_i32_29 = arith.constant 16 : i32
    %87 = arith.muli %c2_i32, %c16_i32_29 : i32
    %88 = tpu.assume_multiple %87, 16 : i32
    %89 = arith.index_cast %88 : i32 to index
    %c0_30 = arith.constant 0 : index
    %90 = vector.load %arg7[%89, %c0_30] : memref<48x512xf32, #tpu.memory_space<vmem>>, vector<16x512xf32>
    %91 = arith.truncf %85 : vector<16x128xf32> to vector<16x128xbf16>
    %c0_31 = arith.constant 0 : index
    %c0_32 = arith.constant 0 : index
    %92 = vector.load %arg4[%c0_31, %c0_32] : memref<128x512xbf16, #tpu.memory_space<vmem>>, vector<128x512xbf16>
    %cst_33 = arith.constant dense<0.000000e+00> : vector<16x512xf32>
    %93 = tpu.matmul %91, %92, %cst_33 {dimension_numbers = #tpu.dot_dimension_numbers<[1], [0], [0], [1], [0, 0, 1, 1], [], []>} : vector<16x128xbf16>, vector<128x512xbf16>, vector<16x512xf32> -> vector<16x512xf32>
    %94 = arith.addf %90, %93 : vector<16x512xf32>
    %95 = vector.extract_strided_slice %94 {offsets = [0, 0], sizes = [16, 128], strides = [1, 1]} : vector<16x512xf32> to vector<16x128xf32>
    %96 = arith.negf %95 : vector<16x128xf32>
    %97 = math.exp %96 : vector<16x128xf32>
    %cst_34 = arith.constant 1.000000e+00 : f32
    %98 = vector.broadcast %cst_34 : f32 to vector<16x128xf32>
    %99 = arith.addf %98, %97 : vector<16x128xf32>
    %100 = arith.divf %98, %99 : vector<16x128xf32>
    %101 = vector.extract_strided_slice %94 {offsets = [0, 128], sizes = [16, 128], strides = [1, 1]} : vector<16x512xf32> to vector<16x128xf32>
    %102 = arith.negf %101 : vector<16x128xf32>
    %103 = math.exp %102 : vector<16x128xf32>
    %cst_35 = arith.constant 1.000000e+00 : f32
    %104 = vector.broadcast %cst_35 : f32 to vector<16x128xf32>
    %105 = arith.addf %104, %103 : vector<16x128xf32>
    %106 = arith.divf %104, %105 : vector<16x128xf32>
    %107 = vector.extract_strided_slice %94 {offsets = [0, 256], sizes = [16, 128], strides = [1, 1]} : vector<16x512xf32> to vector<16x128xf32>
    %108 = math.tanh %107 : vector<16x128xf32>
    %109 = vector.extract_strided_slice %94 {offsets = [0, 384], sizes = [16, 128], strides = [1, 1]} : vector<16x512xf32> to vector<16x128xf32>
    %110 = arith.negf %109 : vector<16x128xf32>
    %111 = math.exp %110 : vector<16x128xf32>
    %cst_36 = arith.constant 1.000000e+00 : f32
    %112 = vector.broadcast %cst_36 : f32 to vector<16x128xf32>
    %113 = arith.addf %112, %111 : vector<16x128xf32>
    %114 = arith.divf %112, %113 : vector<16x128xf32>
    %115 = arith.mulf %106, %86 : vector<16x128xf32>
    %116 = arith.mulf %100, %108 : vector<16x128xf32>
    %117 = arith.addf %115, %116 : vector<16x128xf32>
    %118 = math.tanh %117 : vector<16x128xf32>
    %119 = arith.mulf %114, %118 : vector<16x128xf32>
    %120 = arith.addi %10, %c2_i32 : i32
    %c8_i32_37 = arith.constant 8 : i32
    %121 = arith.cmpi slt, %120, %c8_i32_37 : i32
    %122 = arith.select %121, %119, %85 : vector<16x128xf32>
    %123 = arith.select %121, %117, %86 : vector<16x128xf32>
    %c3_i32_38 = arith.constant 3 : i32
    %c0_39 = arith.constant 0 : index
    %c0_40 = arith.constant 0 : index
    %124 = vector.load %arg8[%c0_39, %c0_40] : memref<16x128xf32, #tpu.memory_space<vmem>>, vector<16x128xf32>
    tpu.vector_store %arg8[%c0_39, %c0_40], %122 {strides = array<i32>} : memref<16x128xf32, #tpu.memory_space<vmem>>, vector<16x128xf32>,
    %c0_41 = arith.constant 0 : index
    %c0_42 = arith.constant 0 : index
    %125 = vector.load %arg9[%c0_41, %c0_42] : memref<16x128xf32, #tpu.memory_space<vmem>>, vector<16x128xf32>
    tpu.vector_store %arg9[%c0_41, %c0_42], %123 {strides = array<i32>} : memref<16x128xf32, #tpu.memory_space<vmem>>, vector<16x128xf32>,
    %c2_i32_43 = arith.constant 2 : i32
    %126 = arith.cmpi eq, %arg1, %c2_i32_43 : i32
    %127 = arith.extui %126 : i1 to i32
    %c0_i32_44 = arith.constant 0 : i32
    %128 = arith.cmpi ne, %127, %c0_i32_44 : i32
    scf.if %128 {
      %c0_45 = arith.constant 0 : index
      %c0_46 = arith.constant 0 : index
      %129 = vector.load %arg6[%c0_45, %c0_46] : memref<16x128xf32, #tpu.memory_space<vmem>>, vector<16x128xf32>
      tpu.vector_store %arg6[%c0_45, %c0_46], %122 {strides = array<i32>} : memref<16x128xf32, #tpu.memory_space<vmem>>, vector<16x128xf32>,
    } else {
    }
    return
  }
  func.func @transform_0(%arg0: i32, %arg1: i32) -> (i32, i32) {
    %c3_i32 = arith.constant 3 : i32
    %0 = arith.muli %arg0, %c3_i32 : i32
    %1 = arith.addi %0, %arg1 : i32
    %c0_i32 = arith.constant 0 : i32
    %c0_i32_0 = arith.constant 0 : i32
    return %1, %c0_i32 : i32, i32
  }
  func.func @transform_1(%arg0: i32, %arg1: i32) -> (i32, i32) {
    %c0_i32 = arith.constant 0 : i32
    %c0_i32_0 = arith.constant 0 : i32
    %c0_i32_1 = arith.constant 0 : i32
    return %c0_i32, %c0_i32_0 : i32, i32
  }
  func.func @transform_2(%arg0: i32, %arg1: i32) -> (i32, i32) {
    %c0_i32 = arith.constant 0 : i32
    %c0_i32_0 = arith.constant 0 : i32
    %c0_i32_1 = arith.constant 0 : i32
    return %c0_i32, %c0_i32_0 : i32, i32
  }
  func.func @transform_3(%arg0: i32, %arg1: i32) -> (i32, i32) {
    %c0_i32 = arith.constant 0 : i32
    %c0_i32_0 = arith.constant 0 : i32
    %c0_i32_1 = arith.constant 0 : i32
    return %c0_i32, %c0_i32_0 : i32, i32
  }
  func.func @transform_4(%arg0: i32, %arg1: i32) -> (i32, i32) {
    %c0_i32 = arith.constant 0 : i32
    %c0_i32_0 = arith.constant 0 : i32
    return %arg0, %c0_i32 : i32, i32
  }
}

</mosaic_0001>

<llo_original>
// kernel: qa_model_forward.3
$region0: #{qa_model_forward.3}
  #allocation0 [shape = 'u32[]', space=smem, size = 0x4, offset = 0x4, fixed_abs, tag = 'smem constant byte address 0x4 - core index']
  #allocation1 [shape = 'u32[144,128]{1,0:T(1,128)}', space=vmem, size = 0x12000, scoped, tag = 'internal scratch']
  %s0 = inlined_call_operand.vmem [shape: f32[16,128], index: 0, kind: input, shape index: {}]
  %s1 = inlined_call_operand.vmem [shape: bf16[128,256], index: 1, kind: input, shape index: {}]
  %s2 = inlined_call_operand.vmem [shape: f32[1,256], index: 2, kind: input, shape index: {}]
  %s3 = inlined_call_operand.vmem [shape: f32[16,256], index: 3, kind: output, shape index: {}]
  %s4 = sld [smem:[#allocation0]]
  $region22: #{qa_model_forward.3} parent=0
    _
  %s6 = ssub.s32 1, %s4
  %s7 = scalar_select 0, %s6, %s4
  // Predicated region
  $region2: #{qa_model_forward.3} parent=0 // pred_check
    _
  $region3: #{qa_model_forward.3} parent=0 // pred_check_branch
    %9 = sbr.rel (0) target = $region5
  $region4: #{qa_model_forward.3} parent=0 // pred_region
    _
  $region5: #{qa_model_forward.3} parent=0 // pred_fallthru
    _
  // Predicated region
  $region6: #{qa_model_forward.3} parent=0 // pred_check
    _
  $region7: #{qa_model_forward.3} parent=0 // pred_check_branch
    %11 = sbr.rel (0) target = $region9
  $region8: #{qa_model_forward.3} parent=0 // pred_region
    _
  $region9: #{qa_model_forward.3} parent=0 // pred_fallthru
    _
  // Predicated region
  $region10: #{qa_model_forward.3} parent=0 // pred_check
    _
  $region11: #{qa_model_forward.3} parent=0 // pred_check_branch
    %13 = sbr.rel (0) target = $region13
  $region12: #{qa_model_forward.3} parent=0 // pred_region
    _
  $region13: #{qa_model_forward.3} parent=0 // pred_fallthru
    _
  %v15 = vld [vmem:[%s0] sm:$0xff]
  %v16 = vld [vmem:[%s0 + $0x8] sm:$0xff]
  %v17 = vpack.c.bf16 %v16, %v15
  %v18 = vld [vmem:[%s1] sm:$0xff]
  %v19 = vld [vmem:[%s1 + $0x8] sm:$0xff]
  %v20 = vld [vmem:[%s1 + $0x10] sm:$0xff]
  %v21 = vld [vmem:[%s1 + $0x18] sm:$0xff]
  %v22 = vld [vmem:[%s1 + $0x20] sm:$0xff]
  %v23 = vld [vmem:[%s1 + $0x28] sm:$0xff]
  %v24 = vld [vmem:[%s1 + $0x30] sm:$0xff]
  %v25 = vld [vmem:[%s1 + $0x38] sm:$0xff]
  %v26 = vld [vmem:[%s1 + $0x40] sm:$0xff]
  %v27 = vld [vmem:[%s1 + $0x48] sm:$0xff]
  %v28 = vld [vmem:[%s1 + $0x50] sm:$0xff]
  %v29 = vld [vmem:[%s1 + $0x58] sm:$0xff]
  %v30 = vld [vmem:[%s1 + $0x60] sm:$0xff]
  %v31 = vld [vmem:[%s1 + $0x68] sm:$0xff]
  %v32 = vld [vmem:[%s1 + $0x70] sm:$0xff]
  %v33 = vld [vmem:[%s1 + $0x78] sm:$0xff]
  %v34 = vld [vmem:[%s2] sm:$0x3]
  %v36 = vlaneseq
  %v37 = vshrl.u32 %v36, 7
  %v38 = vsub.s32 0, %v37
  %v39 = vrot.slane %v34, %v38
  %v40 = vlaneseq
  %v41 = vshrl.u32 %v40, 7
  %v42 = vsub.s32 1, %v41
  %v43 = vrot.slane %v34, %v42
  %v62 = vunpack.c.l.b16 %v18
  %v63 = vunpack.c.h.b16 %v18
  %v64 = vunpack.c.l.b16 %v19
  %v65 = vunpack.c.h.b16 %v19
  %v66 = vunpack.c.l.b16 %v20
  %v67 = vunpack.c.h.b16 %v20
  %v68 = vunpack.c.l.b16 %v21
  %v69 = vunpack.c.h.b16 %v21
  %v70 = vunpack.c.l.b16 %v22
  %v71 = vunpack.c.h.b16 %v22
  %v72 = vunpack.c.l.b16 %v23
  %v73 = vunpack.c.h.b16 %v23
  %v74 = vunpack.c.l.b16 %v24
  %v75 = vunpack.c.h.b16 %v24
  %v76 = vunpack.c.l.b16 %v25
  %v77 = vunpack.c.h.b16 %v25
  %v78 = vunpack.c.l.b16 %v26
  %v79 = vunpack.c.h.b16 %v26
  %v80 = vunpack.c.l.b16 %v27
  %v81 = vunpack.c.h.b16 %v27
  %v82 = vunpack.c.l.b16 %v28
  %v83 = vunpack.c.h.b16 %v28
  %v84 = vunpack.c.l.b16 %v29
  %v85 = vunpack.c.h.b16 %v29
  %v86 = vunpack.c.l.b16 %v30
  %v87 = vunpack.c.h.b16 %v30
  %v88 = vunpack.c.l.b16 %v31
  %v89 = vunpack.c.h.b16 %v31
  %v90 = vunpack.c.l.b16 %v32
  %v91 = vunpack.c.h.b16 %v32
  %v92 = vunpack.c.l.b16 %v33
  %v93 = vunpack.c.h.b16 %v33
  %v94 = vpack.c.b16 %v64, %v62
  %v95 = vpack.c.b16 %v65, %v63
  %v96 = vpack.c.b16 %v68, %v66
  %v97 = vpack.c.b16 %v69, %v67
  %v98 = vpack.c.b16 %v72, %v70
  %v99 = vpack.c.b16 %v73, %v71
  %v100 = vpack.c.b16 %v76, %v74
  %v101 = vpack.c.b16 %v77, %v75
  %v102 = vpack.c.b16 %v80, %v78
  %v103 = vpack.c.b16 %v81, %v79
  %v104 = vpack.c.b16 %v84, %v82
  %v105 = vpack.c.b16 %v85, %v83
  %v106 = vpack.c.b16 %v88, %v86
  %v107 = vpack.c.b16 %v89, %v87
  %v108 = vpack.c.b16 %v92, %v90
  %v109 = vpack.c.b16 %v93, %v91
  %126 = vmatprep.subr.bf16.mxu0 %v95
  %127 = vmatpush1.bf16.msra.mxu0 %v94
  %128 = vmatprep.subr.bf16.mxu0 %v97
  %129 = vmatpush1.bf16.msra.mxu0 %v96
  %130 = vmatprep.subr.bf16.mxu0 %v99
  %131 = vmatpush1.bf16.msra.mxu0 %v98
  %132 = vmatprep.subr.bf16.mxu0 %v101
  %133 = vmatpush1.bf16.msra.mxu0 %v100
  %134 = vmatprep.subr.bf16.mxu0 %v103
  %135 = vmatpush1.bf16.msra.mxu0 %v102
  %136 = vmatprep.subr.bf16.mxu0 %v105
  %137 = vmatpush1.bf16.msra.mxu0 %v104
  %138 = vmatprep.subr.bf16.mxu0 %v107
  %139 = vmatpush1.bf16.msra.mxu0 %v106
  %140 = vmatprep.subr.bf16.mxu0 %v109
  %141 = vmatpush1.bf16.msra.mxu0 %v108
  %142 = vmatprep.subr.bf16.mxu0 0
  %143 = vmatpush1.bf16.msra.mxu0 0
  %144 = vmatprep.subr.bf16.mxu0 0
  %145 = vmatpush1.bf16.msra.mxu0 0
  %146 = vmatprep.subr.bf16.mxu0 0
  %147 = vmatpush1.bf16.msra.mxu0 0
  %148 = vmatprep.subr.bf16.mxu0 0
  %149 = vmatpush1.bf16.msra.mxu0 0
  %150 = vmatprep.subr.bf16.mxu0 0
  %151 = vmatpush1.bf16.msra.mxu0 0
  %152 = vmatprep.subr.bf16.mxu0 0
  %153 = vmatpush1.bf16.msra.mxu0 0
  %154 = vmatprep.subr.bf16.mxu0 0
  %155 = vmatpush1.bf16.msra.mxu0 0
  %156 = vmatprep.subr.bf16.mxu0 0
  %157 = vmatpush1.bf16.msra.mxu0 0
  %158 = vmatprep.mubr.bf16.mxu0 0
  %159 = vmatmul.mubr.bf16.gmra.mrb[0].mxu0 %v17
  %v160 = vpop.f32.mrb[0].mxu0
  %v161 = vadd.f32 %v39, %v160
  %v162 = vpop.f32.mrb[0].mxu0
  %v163 = vadd.f32 %v43, %v162
  %v164 = vpop.f32.mrb[0].mxu0
  %v165 = vadd.f32 %v39, %v164
  %v166 = vpop.f32.mrb[0].mxu0
  %v167 = vadd.f32 %v43, %v166
  %168 = vdwg.mxu0
  %169 = vst [vmem:[%s3] sm:$0xff] %v161
  %170 = vst [vmem:[%s3 + $0x8] sm:$0xff] %v163
  %171 = vst [vmem:[%s3 + $0x10] sm:$0xff] %v165
  %172 = vst [vmem:[%s3 + $0x18] sm:$0xff] %v167
  // Predicated region
  $region14: #{qa_model_forward.3} parent=0 // pred_check
    _
  $region15: #{qa_model_forward.3} parent=0 // pred_check_branch
    %174 = sbr.rel (0) target = $region17
  $region16: #{qa_model_forward.3} parent=0 // pred_region
    _
  $region17: #{qa_model_forward.3} parent=0 // pred_fallthru
    _
  // Predicated region
  $region18: #{qa_model_forward.3} parent=0 // pred_check
    _
  $region19: #{qa_model_forward.3} parent=0 // pred_check_branch
    %176 = sbr.rel (0) target = $region21
  $region20: #{qa_model_forward.3} parent=0 // pred_region
    _
  $region21: #{qa_model_forward.3} parent=0 // pred_fallthru
    _

// kernel: qa_model_forward.2
$region0: #{qa_model_forward.2}
  #allocation0 [shape = 'u32[]', space=smem, size = 0x4, offset = 0x4, fixed_abs, tag = 'smem constant byte address 0x4 - core index']
  #allocation1 [shape = 'u32[144,128]{1,0:T(1,128)}', space=vmem, size = 0x12000, scoped, tag = 'internal scratch']
  #allocation2 [shape = 'f32[48,512]{1,0:T(8,128)}', space=vmem, size = 0x18000, scoped, tag = 'scratch operand']
  #allocation3 [shape = 'f32[16,128]{1,0:T(8,128)}', space=vmem, size = 0x2000, scoped, tag = 'scratch operand']
  #allocation4 [shape = 'f32[16,128]{1,0:T(8,128)}', space=vmem, size = 0x2000, scoped, tag = 'scratch operand']
  %s0 = inlined_call_operand.vmem [shape: bf16[144,128], index: 0, kind: input, shape index: {}]
  %s1 = inlined_call_operand.vmem [shape: bf16[128,512], index: 1, kind: input, shape index: {}]
  %s2 = inlined_call_operand.vmem [shape: bf16[128,512], index: 2, kind: input, shape index: {}]
  %s3 = inlined_call_operand.vmem [shape: f32[1,512], index: 3, kind: input, shape index: {}]
  %s4 = inlined_call_operand.vmem [shape: f32[16,128], index: 4, kind: output, shape index: {}]
  %s5 = sld [smem:[#allocation0]]
  $region57: #{qa_model_forward.2} parent=0
    _
  %s7 = ssub.s32 1, %s5
  %s8 = scalar_select 0, %s7, %s5
  loop: start=0, step=1, limit=5
  $region2: #{qa_model_forward.2} parent=0 // loop_pre_header
    _
  $region3: #{qa_model_forward.2} parent=0 // loop_header
    %s10 = sphi 0, %s14
    %p11 = scmp.ge.s32.totalorder %s10, 5
    %s17 = sphi 0, %s29
    %s18 = sphi 0, %s25
    %s19 = sphi 0, %s17
    %s20 = sphi 0, %s18
    %s21 = sphi 0, %s19
    %s22 = sphi 0, %s20
    %s36 = sphi 0, %s38
    %s39 = sphi 0, %s36
    %s40 = sphi 0, %s39
    %s56 = sphi 0, %s40
    %s60 = sphi 0, %s60
    %s62 = sphi 0, %s60
    %s63 = sphi 0, %s62
    %s77 = sphi 0, %s63
    %s81 = sphi 0, %s81
    %s83 = sphi 0, %s81
    %s84 = sphi 0, %s83
    %s98 = sphi 0, %s84
    %s102 = sphi 0, %s102
    %s104 = sphi 0, %s102
    %s105 = sphi 0, %s104
    %s119 = sphi 0, %s105
    %s125 = sphi 0, %s127
    %s128 = sphi 0, %s125
    %s129 = sphi 0, %s128
    %s145 = sphi 0, %s129
  $region4: #{qa_model_forward.2} parent=0 // loop_header_branch
    %13 = sbr.rel (%p11) target = $region8
  $region5: #{qa_model_forward.2} parent=0 // loop_body
    %s15 = ssub.s32 %s10, 1
    %s16 = ssub.s32 %s10, 2
    %s23 = sadd.s32 1, %s18
    %p24 = scmp.ge.s32.totalorder %s23, 3
    %s25 = scalar_select %p24, 0, %s23
    %s26 = sadd.s32 1, %s17
    %s27 = scalar_select %p24, %s26, %s17
    %p28 = scmp.ge.s32.totalorder %s27, 1
    %s29 = scalar_select %p28, 0, %s27
    %s30 = smul.u32 %s17, 3
    %s31 = sadd.s32 %s30, %s18
    %s32 = smul.u32 %s29, 3
    %s33 = sadd.s32 %s32, %s25
    %s34 = ssub.s32 %s31, %s33
    %p35 = scmp.eq.s32.totalorder %s34, 0
    %s37 = sadd.s32 %s36, 1
    %s38 = scalar_select %p35, %s36, %s37
    %p41 = pneg %p35
    %p42 = scmp.eq.s32.totalorder %s10, 2
    %p43 = por %p41, %p42
    %p44 = scmp.ne.s32.totalorder %s36, %s39
    %p45 = scmp.eq.s32.totalorder %s10, 0
    %p46 = por %p44, %p45
    %p47 = scmp.ne.s32.totalorder %s36, %s39
    %p48 = scmp.eq.s32.totalorder %s15, 2
    %p49 = por %p47, %p48
    %p50 = scmp.ne.s32.totalorder %s39, %s40
    %p51 = scmp.eq.s32.totalorder %s15, 0
    %p52 = por %p50, %p51
    %p53 = scmp.ne.s32.totalorder %s39, %s40
    %p54 = scmp.eq.s32.totalorder %s16, 2
    %p55 = por %p53, %p54
    %p57 = scmp.ne.s32.totalorder %s40, %s56
    %p58 = scmp.eq.s32.totalorder %s16, 0
    %p59 = por %p57, %p58
    %s61 = sadd.s32 %s60, 1
    %p64 = scmp.eq.s32.totalorder %s10, 2
    %p65 = scmp.ne.s32.totalorder %s60, %s62
    %p66 = scmp.eq.s32.totalorder %s10, 0
    %p67 = por %p65, %p66
    %p68 = scmp.ne.s32.totalorder %s60, %s62
    %p69 = scmp.eq.s32.totalorder %s15, 2
    %p70 = por %p68, %p69
    %p71 = scmp.ne.s32.totalorder %s62, %s63
    %p72 = scmp.eq.s32.totalorder %s15, 0
    %p73 = por %p71, %p72
    %p74 = scmp.ne.s32.totalorder %s62, %s63
    %p75 = scmp.eq.s32.totalorder %s16, 2
    %p76 = por %p74, %p75
    %p78 = scmp.ne.s32.totalorder %s63, %s77
    %p79 = scmp.eq.s32.totalorder %s16, 0
    %p80 = por %p78, %p79
    %s82 = sadd.s32 %s81, 1
    %p85 = scmp.eq.s32.totalorder %s10, 2
    %p86 = scmp.ne.s32.totalorder %s81, %s83
    %p87 = scmp.eq.s32.totalorder %s10, 0
    %p88 = por %p86, %p87
    %p89 = scmp.ne.s32.totalorder %s81, %s83
    %p90 = scmp.eq.s32.totalorder %s15, 2
    %p91 = por %p89, %p90
    %p92 = scmp.ne.s32.totalorder %s83, %s84
    %p93 = scmp.eq.s32.totalorder %s15, 0
    %p94 = por %p92, %p93
    %p95 = scmp.ne.s32.totalorder %s83, %s84
    %p96 = scmp.eq.s32.totalorder %s16, 2
    %p97 = por %p95, %p96
    %p99 = scmp.ne.s32.totalorder %s84, %s98
    %p100 = scmp.eq.s32.totalorder %s16, 0
    %p101 = por %p99, %p100
    %s103 = sadd.s32 %s102, 1
    %p106 = scmp.eq.s32.totalorder %s10, 2
    %p107 = scmp.ne.s32.totalorder %s102, %s104
    %p108 = scmp.eq.s32.totalorder %s10, 0
    %p109 = por %p107, %p108
    %p110 = scmp.ne.s32.totalorder %s102, %s104
    %p111 = scmp.eq.s32.totalorder %s15, 2
    %p112 = por %p110, %p111
    %p113 = scmp.ne.s32.totalorder %s104, %s105
    %p114 = scmp.eq.s32.totalorder %s15, 0
    %p115 = por %p113, %p114
    %p116 = scmp.ne.s32.totalorder %s104, %s105
    %p117 = scmp.eq.s32.totalorder %s16, 2
    %p118 = por %p116, %p117
    %p120 = scmp.ne.s32.totalorder %s105, %s119
    %p121 = scmp.eq.s32.totalorder %s16, 0
    %p122 = por %p120, %p121
    %s123 = ssub.s32 %s17, %s29
    %p124 = scmp.eq.s32.totalorder %s123, 0
    %s126 = sadd.s32 %s125, 1
    %s127 = scalar_select %p124, %s125, %s126
    %p130 = pneg %p124
    %p131 = scmp.eq.s32.totalorder %s10, 2
    %p132 = por %p130, %p131
    %p133 = scmp.ne.s32.totalorder %s125, %s128
    %p134 = scmp.eq.s32.totalorder %s10, 0
    %p135 = por %p133, %p134
    %p136 = scmp.ne.s32.totalorder %s125, %s128
    %p137 = scmp.eq.s32.totalorder %s15, 2
    %p138 = por %p136, %p137
    %p139 = scmp.ne.s32.totalorder %s128, %s129
    %p140 = scmp.eq.s32.totalorder %s15, 0
    %p141 = por %p139, %p140
    %p142 = scmp.ne.s32.totalorder %s128, %s129
    %p143 = scmp.eq.s32.totalorder %s16, 2
    %p144 = por %p142, %p143
    %p146 = scmp.ne.s32.totalorder %s129, %s145
    %p147 = scmp.eq.s32.totalorder %s16, 0
    %p148 = por %p146, %p147
    %p149 = scmp.le.s32.totalorder 1, %s10
    %p150 = scmp.lt.s32.totalorder %s10, 4
    %p151 = pnand %p149, %p150
    %p152 = pneg %p151
    // Predicated region
    $region9: #{qa_model_forward.2} parent=5 // pred_check
      _
    $region10: #{qa_model_forward.2} parent=5 // pred_check_branch
      %154 = sbr.rel (%p151) target = $region12
    $region11: #{qa_model_forward.2} parent=5 // pred_region
      %s155 = ssub.s32 %s10, 1
      // Predicated region
      $region13: #{qa_model_forward.2} parent=11 // pred_check
        %p156 = pneg %p73
      $region14: #{qa_model_forward.2} parent=11 // pred_check_branch
        %158 = sbr.rel (%p156) target = $region16
      $region15: #{qa_model_forward.2} parent=11 // pred_region
        _
      $region16: #{qa_model_forward.2} parent=11 // pred_fallthru
        _
      // Predicated region
      $region17: #{qa_model_forward.2} parent=11 // pred_check
        %p159 = pneg %p94
      $region18: #{qa_model_forward.2} parent=11 // pred_check_branch
        %161 = sbr.rel (%p159) target = $region20
      $region19: #{qa_model_forward.2} parent=11 // pred_region
        _
      $region20: #{qa_model_forward.2} parent=11 // pred_fallthru
        _
      // Predicated region
      $region21: #{qa_model_forward.2} parent=11 // pred_check
        %p162 = pneg %p115
      $region22: #{qa_model_forward.2} parent=11 // pred_check_branch
        %164 = sbr.rel (%p162) target = $region24
      $region23: #{qa_model_forward.2} parent=11 // pred_region
        _
      $region24: #{qa_model_forward.2} parent=11 // pred_fallthru
        _
    $region12: #{qa_model_forward.2} parent=5 // pred_fallthru
      _
    %p165 = scmp.lt.s32.totalorder %s10, 3
    // Predicated region
    $region25: #{qa_model_forward.2} parent=5 // pred_check
      %p166 = pneg %p165
    $region26: #{qa_model_forward.2} parent=5 // pred_check_branch
      %168 = sbr.rel (%p166) target = $region28
    $region27: #{qa_model_forward.2} parent=5 // pred_region
      // Predicated region
      $region29: #{qa_model_forward.2} parent=27 // pred_check
        %p169 = pneg %p46
      $region30: #{qa_model_forward.2} parent=27 // pred_check_branch
        %171 = sbr.rel (%p169) target = $region32
      $region31: #{qa_model_forward.2} parent=27 // pred_region
        %s172 = smul.u32 %s17, 3
        %s173 = sadd.s32 %s172, %s18
        %s174 = smul.u32 6, %s173
        %p175 = scmp.lt.s32.totalorder %s174, 17
        %s176 = scalar_select %p175, %s174, 17
        %s177 = smul.addr %s176, 4
        %s178 = scalar_lea.vmem %s0, %s177
        %s179 = smul.u32 %s17, 3
        %s180 = sadd.s32 %s179, %s18
        %s181 = smul.u32 6, %s180
      $region32: #{qa_model_forward.2} parent=27 // pred_fallthru
        _
    $region28: #{qa_model_forward.2} parent=5 // pred_fallthru
      _
    %p182 = scmp.le.s32.totalorder 1, %s10
    %p183 = scmp.lt.s32.totalorder %s10, 4
    %p184 = pnand %p182, %p183
    %p185 = pneg %p184
    // Predicated region
    $region33: #{qa_model_forward.2} parent=5 // pred_check
      _
    $region34: #{qa_model_forward.2} parent=5 // pred_check_branch
      %187 = sbr.rel (%p184) target = $region36
    $region35: #{qa_model_forward.2} parent=5 // pred_region
      %s188 = ssub.s32 %s10, 1
      %s189 = smul.u32 %s19, 3
      %s190 = sadd.s32 %s189, %s20
      %s191 = smul.u32 6, %s190
      %p192 = scmp.lt.s32.totalorder %s191, 17
      %s193 = scalar_select %p192, %s191, 17
      %s194 = smul.addr %s193, 4
      %s195 = scalar_lea.vmem %s0, %s194
      %p196 = pneg %p52
      %p197 = pneg %p49
      %p198 = pneg %p73
      %p199 = pneg %p70
      %p200 = pneg %p94
      %p201 = pneg %p91
      %p202 = pneg %p115
      %p203 = pneg %p112
      %p204 = pneg %p141
      %p205 = pneg %p138
      %s206 = smul.u32 2, %s19
      %p207 = scmp.lt.s32.totalorder %s206, 1
      %s208 = scalar_select %p207, %s206, 1
      %s209 = smul.addr %s208, 8
      %s210 = scalar_lea.vmem %s4, %s209
      %s211 = smul.u32 %s19, 3
      %s212 = sadd.s32 %s211, %s20
      %s213 = smul.u32 6, %s212
      %p214 = scmp.lt.s32.totalorder %s213, 17
      %s215 = scalar_select %p214, %s213, 17
      %s216 = smul.addr %s215, 4
      %s217 = scalar_lea.vmem %s0, %s216
      %s218 = smul.u32 %s19, 3
      %s219 = sadd.s32 %s218, %s20
      %s220 = smul.u32 6, %s219
      %s221 = smul.u32 2, %s19
      %p222 = scmp.lt.s32.totalorder %s221, 1
      %s223 = scalar_select %p222, %s221, 1
      %s224 = smul.addr %s223, 8
      %s225 = scalar_lea.vmem %s4, %s224
      %s226 = smul.u32 2, %s19
      %p228 = scmp.eq.s32.totalorder %s20, 0
      // Predicated region
      $region37: #{qa_model_forward.2} parent=35 // pred_check
        %p229 = pneg %p228
      $region38: #{qa_model_forward.2} parent=35 // pred_check_branch
        %231 = sbr.rel (%p229) target = $region40
      $region39: #{qa_model_forward.2} parent=35 // pred_region
        %232 = vst [vmem:[#allocation3] sm:$0xff] 0.0
        %233 = vst [vmem:[#allocation3 + $0x8] sm:$0xff] 0.0
        %234 = vst [vmem:[#allocation4] sm:$0xff] 0.0
        %235 = vst [vmem:[#allocation4 + $0x8] sm:$0xff] 0.0
      $region40: #{qa_model_forward.2} parent=35 // pred_fallthru
        _
      %v236 = vld [vmem:[%s217] sm:$0xf]
      %v237 = vld [vmem:[%s217 + $0x4] sm:$0xf]
      %v238 = vld [vmem:[%s217 + $0x8] sm:$0xf]
      %v239 = vld [vmem:[%s217 + $0xc] sm:$0xf]
      %v240 = vld [vmem:[%s217 + $0x10] sm:$0xf]
      %v241 = vld [vmem:[%s217 + $0x14] sm:$0xf]
      %v242 = vld [vmem:[%s1] sm:$0xff]
      %v243 = vld [vmem:[%s1 + $0x8] sm:$0xff]
      %v244 = vld [vmem:[%s1 + $0x10] sm:$0xff]
      %v245 = vld [vmem:[%s1 + $0x18] sm:$0xff]
      %v246 = vld [vmem:[%s1 + $0x20] sm:$0xff]
      %v247 = vld [vmem:[%s1 + $0x28] sm:$0xff]
      %v248 = vld [vmem:[%s1 + $0x30] sm:$0xff]
      %v249 = vld [vmem:[%s1 + $0x38] sm:$0xff]
      %v250 = vld [vmem:[%s1 + $0x40] sm:$0xff]
      %v251 = vld [vmem:[%s1 + $0x48] sm:$0xff]
      %v252 = vld [vmem:[%s1 + $0x50] sm:$0xff]
      %v253 = vld [vmem:[%s1 + $0x58] sm:$0xff]
      %v254 = vld [vmem:[%s1 + $0x60] sm:$0xff]
      %v255 = vld [vmem:[%s1 + $0x68] sm:$0xff]
      %v256 = vld [vmem:[%s1 + $0x70] sm:$0xff]
      %v257 = vld [vmem:[%s1 + $0x78] sm:$0xff]
      %v258 = vld [vmem:[%s1 + $0x80] sm:$0xff]
      %v259 = vld [vmem:[%s1 + $0x88] sm:$0xff]
      %v260 = vld [vmem:[%s1 + $0x90] sm:$0xff]
      %v261 = vld [vmem:[%s1 + $0x98] sm:$0xff]
      %v262 = vld [vmem:[%s1 + $0xa0] sm:$0xff]
      %v263 = vld [vmem:[%s1 + $0xa8] sm:$0xff]
      %v264 = vld [vmem:[%s1 + $0xb0] sm:$0xff]
      %v265 = vld [vmem:[%s1 + $0xb8] sm:$0xff]
      %v266 = vld [vmem:[%s1 + $0xc0] sm:$0xff]
      %v267 = vld [vmem:[%s1 + $0xc8] sm:$0xff]
      %v268 = vld [vmem:[%s1 + $0xd0] sm:$0xff]
      %v269 = vld [vmem:[%s1 + $0xd8] sm:$0xff]
      %v270 = vld [vmem:[%s1 + $0xe0] sm:$0xff]
      %v271 = vld [vmem:[%s1 + $0xe8] sm:$0xff]
      %v272 = vld [vmem:[%s1 + $0xf0] sm:$0xff]
      %v273 = vld [vmem:[%s1 + $0xf8] sm:$0xff]
      %v274 = vld [vmem:[%s3] sm:$0xf]
      %v276 = vlaneseq
      %v277 = vshrl.u32 %v276, 7
      %v278 = vsub.s32 0, %v277
      %v279 = vrot.slane %v274, %v278
      %v280 = vlaneseq
      %v281 = vshrl.u32 %v280, 7
      %v282 = vsub.s32 1, %v281
      %v283 = vrot.slane %v274, %v282
      %v284 = vlaneseq
      %v285 = vshrl.u32 %v284, 7
      %v286 = vsub.s32 2, %v285
      %v287 = vrot.slane %v274, %v286
      %v288 = vlaneseq
      %v289 = vshrl.u32 %v288, 7
      %v290 = vsub.s32 3, %v289
      %v291 = vrot.slane %v274, %v290
      %v302 = vunpack.c.l.b16 %v236
      %v303 = vunpack.c.l.b16 %v237
      %v304 = vunpack.c.l.b16 %v238
      %v305 = vunpack.c.l.b16 %v239
      %v306 = vunpack.c.l.b16 %v240
      %v307 = vunpack.c.l.b16 %v241
      %v308 = vpack.c.b16 %v303, %v302
      %v309 = vpack.c.b16 %v305, %v304
      %v310 = vpack.c.b16 %v307, %v306
      %v346 = vunpack.c.l.b16 %v242
      %v347 = vunpack.c.h.b16 %v242
      %v348 = vunpack.c.l.b16 %v243
      %v349 = vunpack.c.h.b16 %v243
      %v350 = vunpack.c.l.b16 %v244
      %v351 = vunpack.c.h.b16 %v244
      %v352 = vunpack.c.l.b16 %v245
      %v353 = vunpack.c.h.b16 %v245
      %v354 = vunpack.c.l.b16 %v246
      %v355 = vunpack.c.h.b16 %v246
      %v356 = vunpack.c.l.b16 %v247
      %v357 = vunpack.c.h.b16 %v247
      %v358 = vunpack.c.l.b16 %v248
      %v359 = vunpack.c.h.b16 %v248
      %v360 = vunpack.c.l.b16 %v249
      %v361 = vunpack.c.h.b16 %v249
      %v362 = vunpack.c.l.b16 %v250
      %v363 = vunpack.c.h.b16 %v250
      %v364 = vunpack.c.l.b16 %v251
      %v365 = vunpack.c.h.b16 %v251
      %v366 = vunpack.c.l.b16 %v252
      %v367 = vunpack.c.h.b16 %v252
      %v368 = vunpack.c.l.b16 %v253
      %v369 = vunpack.c.h.b16 %v253
      %v370 = vunpack.c.l.b16 %v254
      %v371 = vunpack.c.h.b16 %v254
      %v372 = vunpack.c.l.b16 %v255
      %v373 = vunpack.c.h.b16 %v255
      %v374 = vunpack.c.l.b16 %v256
      %v375 = vunpack.c.h.b16 %v256
      %v376 = vunpack.c.l.b16 %v257
      %v377 = vunpack.c.h.b16 %v257
      %v378 = vunpack.c.l.b16 %v258
      %v379 = vunpack.c.h.b16 %v258
      %v380 = vunpack.c.l.b16 %v259
      %v381 = vunpack.c.h.b16 %v259
      %v382 = vunpack.c.l.b16 %v260
      %v383 = vunpack.c.h.b16 %v260
      %v384 = vunpack.c.l.b16 %v261
      %v385 = vunpack.c.h.b16 %v261
      %v386 = vunpack.c.l.b16 %v262
      %v387 = vunpack.c.h.b16 %v262
      %v388 = vunpack.c.l.b16 %v263
      %v389 = vunpack.c.h.b16 %v263
      %v390 = vunpack.c.l.b16 %v264
      %v391 = vunpack.c.h.b16 %v264
      %v392 = vunpack.c.l.b16 %v265
      %v393 = vunpack.c.h.b16 %v265
      %v394 = vunpack.c.l.b16 %v266
      %v395 = vunpack.c.h.b16 %v266
      %v396 = vunpack.c.l.b16 %v267
      %v397 = vunpack.c.h.b16 %v267
      %v398 = vunpack.c.l.b16 %v268
      %v399 = vunpack.c.h.b16 %v268
      %v400 = vunpack.c.l.b16 %v269
      %v401 = vunpack.c.h.b16 %v269
      %v402 = vunpack.c.l.b16 %v270
      %v403 = vunpack.c.h.b16 %v270
      %v404 = vunpack.c.l.b16 %v271
      %v405 = vunpack.c.h.b16 %v271
      %v406 = vunpack.c.l.b16 %v272
      %v407 = vunpack.c.h.b16 %v272
      %v408 = vunpack.c.l.b16 %v273
      %v409 = vunpack.c.h.b16 %v273
      %v410 = vpack.c.b16 %v350, %v346
      %v411 = vpack.c.b16 %v351, %v347
      %v412 = vpack.c.b16 %v352, %v348
      %v413 = vpack.c.b16 %v353, %v349
      %v414 = vpack.c.b16 %v358, %v354
      %v415 = vpack.c.b16 %v359, %v355
      %v416 = vpack.c.b16 %v360, %v356
      %v417 = vpack.c.b16 %v361, %v357
      %v418 = vpack.c.b16 %v366, %v362
      %v419 = vpack.c.b16 %v367, %v363
      %v420 = vpack.c.b16 %v368, %v364
      %v421 = vpack.c.b16 %v369, %v365
      %v422 = vpack.c.b16 %v374, %v370
      %v423 = vpack.c.b16 %v375, %v371
      %v424 = vpack.c.b16 %v376, %v372
      %v425 = vpack.c.b16 %v377, %v373
      %v426 = vpack.c.b16 %v382, %v378
      %v427 = vpack.c.b16 %v383, %v379
      %v428 = vpack.c.b16 %v384, %v380
      %v429 = vpack.c.b16 %v385, %v381
      %v430 = vpack.c.b16 %v390, %v386
      %v431 = vpack.c.b16 %v391, %v387
      %v432 = vpack.c.b16 %v392, %v388
      %v433 = vpack.c.b16 %v393, %v389
      %v434 = vpack.c.b16 %v398, %v394
      %v435 = vpack.c.b16 %v399, %v395
      %v436 = vpack.c.b16 %v400, %v396
      %v437 = vpack.c.b16 %v401, %v397
      %v438 = vpack.c.b16 %v406, %v402
      %v439 = vpack.c.b16 %v407, %v403
      %v440 = vpack.c.b16 %v408, %v404
      %v441 = vpack.c.b16 %v409, %v405
      %474 = vmatprep.subr.bf16.mxu0 %v411
      %475 = vmatpush1.bf16.msra.mxu0 %v410
      %476 = vmatprep.subr.bf16.mxu0 %v415
      %477 = vmatpush1.bf16.msra.mxu0 %v414
      %478 = vmatprep.subr.bf16.mxu0 %v419
      %479 = vmatpush1.bf16.msra.mxu0 %v418
      %480 = vmatprep.subr.bf16.mxu0 %v423
      %481 = vmatpush1.bf16.msra.mxu0 %v422
      %482 = vmatprep.subr.bf16.mxu0 %v427
      %483 = vmatpush1.bf16.msra.mxu0 %v426
      %484 = vmatprep.subr.bf16.mxu0 %v431
      %485 = vmatpush1.bf16.msra.mxu0 %v430
      %486 = vmatprep.subr.bf16.mxu0 %v435
      %487 = vmatpush1.bf16.msra.mxu0 %v434
      %488 = vmatprep.subr.bf16.mxu0 %v439
      %489 = vmatpush1.bf16.msra.mxu0 %v438
      %490 = vmatprep.subr.bf16.mxu0 0
      %491 = vmatpush1.bf16.msra.mxu0 0
      %492 = vmatprep.subr.bf16.mxu0 0
      %493 = vmatpush1.bf16.msra.mxu0 0
      %494 = vmatprep.subr.bf16.mxu0 0
      %495 = vmatpush1.bf16.msra.mxu0 0
      %496 = vmatprep.subr.bf16.mxu0 0
      %497 = vmatpush1.bf16.msra.mxu0 0
      %498 = vmatprep.subr.bf16.mxu0 0
      %499 = vmatpush1.bf16.msra.mxu0 0
      %500 = vmatprep.subr.bf16.mxu0 0
      %501 = vmatpush1.bf16.msra.mxu0 0
      %502 = vmatprep.subr.bf16.mxu0 0
      %503 = vmatpush1.bf16.msra.mxu0 0
      %504 = vmatprep.subr.bf16.mxu0 0
      %505 = vmatpush1.bf16.msra.mxu0 0
      %506 = vmatprep.mubr.bf16.mxu0 0
      %507 = vmatmul.mubr.bf16.gmra.mrb[0].mxu0 %v308
      %v508 = vpop.f32.mrb[0].mxu0
      %v509 = vadd.f32 %v279, %v508
      %v510 = vpop.f32.mrb[0].mxu0
      %v511 = vadd.f32 %v283, %v510
      %v512 = vpop.f32.mrb[0].mxu0
      %v513 = vadd.f32 %v279, %v512
      %v514 = vpop.f32.mrb[0].mxu0
      %v515 = vadd.f32 %v283, %v514
      %516 = vmatprep.mubr.bf16.mxu0 0
      %517 = vmatmul.mubr.bf16.gmra.mrb[0].mxu0 %v309
      %v518 = vpop.f32.mrb[0].mxu0
      %v519 = vadd.f32 %v279, %v518
      %v520 = vpop.f32.mrb[0].mxu0
      %v521 = vadd.f32 %v283, %v520
      %v522 = vpop.f32.mrb[0].mxu0
      %v523 = vadd.f32 %v279, %v522
      %v524 = vpop.f32.mrb[0].mxu0
      %v525 = vadd.f32 %v283, %v524
      %526 = vmatprep.mubr.bf16.mxu0 0
      %527 = vmatmul.mubr.bf16.gmra.mrb[0].mxu0 %v310
      %v528 = vpop.f32.mrb[0].mxu0
      %v529 = vadd.f32 %v279, %v528
      %v530 = vpop.f32.mrb[0].mxu0
      %v531 = vadd.f32 %v283, %v530
      %v532 = vpop.f32.mrb[0].mxu0
      %v533 = vadd.f32 %v279, %v532
      %v534 = vpop.f32.mrb[0].mxu0
      %v535 = vadd.f32 %v283, %v534
      %536 = vdwg.mxu0
      %537 = vmatprep.subr.bf16.mxu0 %v413
      %538 = vmatpush1.bf16.msra.mxu0 %v412
      %539 = vmatprep.subr.bf16.mxu0 %v417
      %540 = vmatpush1.bf16.msra.mxu0 %v416
      %541 = vmatprep.subr.bf16.mxu0 %v421
      %542 = vmatpush1.bf16.msra.mxu0 %v420
      %543 = vmatprep.subr.bf16.mxu0 %v425
      %544 = vmatpush1.bf16.msra.mxu0 %v424
      %545 = vmatprep.subr.bf16.mxu0 %v429
      %546 = vmatpush1.bf16.msra.mxu0 %v428
      %547 = vmatprep.subr.bf16.mxu0 %v433
      %548 = vmatpush1.bf16.msra.mxu0 %v432
      %549 = vmatprep.subr.bf16.mxu0 %v437
      %550 = vmatpush1.bf16.msra.mxu0 %v436
      %551 = vmatprep.subr.bf16.mxu0 %v441
      %552 = vmatpush1.bf16.msra.mxu0 %v440
      %553 = vmatprep.subr.bf16.mxu0 0
      %554 = vmatpush1.bf16.msra.mxu0 0
      %555 = vmatprep.subr.bf16.mxu0 0
      %556 = vmatpush1.bf16.msra.mxu0 0
      %557 = vmatprep.subr.bf16.mxu0 0
      %558 = vmatpush1.bf16.msra.mxu0 0
      %559 = vmatprep.subr.bf16.mxu0 0
      %560 = vmatpush1.bf16.msra.mxu0 0
      %561 = vmatprep.subr.bf16.mxu0 0
      %562 = vmatpush1.bf16.msra.mxu0 0
      %563 = vmatprep.subr.bf16.mxu0 0
      %564 = vmatpush1.bf16.msra.mxu0 0
      %565 = vmatprep.subr.bf16.mxu0 0
      %566 = vmatpush1.bf16.msra.mxu0 0
      %567 = vmatprep.subr.bf16.mxu0 0
      %568 = vmatpush1.bf16.msra.mxu0 0
      %569 = vmatprep.mubr.bf16.mxu0 0
      %570 = vmatmul.mubr.bf16.gmra.mrb[0].mxu0 %v308
      %v571 = vpop.f32.mrb[0].mxu0
      %v572 = vadd.f32 %v287, %v571
      %v573 = vpop.f32.mrb[0].mxu0
      %v574 = vadd.f32 %v291, %v573
      %v575 = vpop.f32.mrb[0].mxu0
      %v576 = vadd.f32 %v287, %v575
      %v577 = vpop.f32.mrb[0].mxu0
      %v578 = vadd.f32 %v291, %v577
      %579 = vmatprep.mubr.bf16.mxu0 0
      %580 = vmatmul.mubr.bf16.gmra.mrb[0].mxu0 %v309
      %v581 = vpop.f32.mrb[0].mxu0
      %v582 = vadd.f32 %v287, %v581
      %v583 = vpop.f32.mrb[0].mxu0
      %v584 = vadd.f32 %v291, %v583
      %v585 = vpop.f32.mrb[0].mxu0
      %v586 = vadd.f32 %v287, %v585
      %v587 = vpop.f32.mrb[0].mxu0
      %v588 = vadd.f32 %v291, %v587
      %589 = vmatprep.mubr.bf16.mxu0 0
      %590 = vmatmul.mubr.bf16.gmra.mrb[0].mxu0 %v310
      %v591 = vpop.f32.mrb[0].mxu0
      %v592 = vadd.f32 %v287, %v591
      %v593 = vpop.f32.mrb[0].mxu0
      %v594 = vadd.f32 %v291, %v593
      %v595 = vpop.f32.mrb[0].mxu0
      %v596 = vadd.f32 %v287, %v595
      %v597 = vpop.f32.mrb[0].mxu0
      %v598 = vadd.f32 %v291, %v597
      %599 = vdwg.mxu0
      %600 = vst [vmem:[#allocation2] sm:$0xff] %v509
      %601 = vst [vmem:[#allocation2 + $0x8] sm:$0xff] %v511
      %602 = vst [vmem:[#allocation2 + $0x10] sm:$0xff] %v572
      %603 = vst [vmem:[#allocation2 + $0x18] sm:$0xff] %v574
      %604 = vst [vmem:[#allocation2 + $0x20] sm:$0xff] %v513
      %605 = vst [vmem:[#allocation2 + $0x28] sm:$0xff] %v515
      %606 = vst [vmem:[#allocation2 + $0x30] sm:$0xff] %v576
      %607 = vst [vmem:[#allocation2 + $0x38] sm:$0xff] %v578
      %608 = vst [vmem:[#allocation2 + $0x40] sm:$0xff] %v519
      %609 = vst [vmem:[#allocation2 + $0x48] sm:$0xff] %v521
      %610 = vst [vmem:[#allocation2 + $0x50] sm:$0xff] %v582
      %611 = vst [vmem:[#allocation2 + $0x58] sm:$0xff] %v584
      %612 = vst [vmem:[#allocation2 + $0x60] sm:$0xff] %v523
      %613 = vst [vmem:[#allocation2 + $0x68] sm:$0xff] %v525
      %614 = vst [vmem:[#allocation2 + $0x70] sm:$0xff] %v586
      %615 = vst [vmem:[#allocation2 + $0x78] sm:$0xff] %v588
      %616 = vst [vmem:[#allocation2 + $0x80] sm:$0xff] %v529
      %617 = vst [vmem:[#allocation2 + $0x88] sm:$0xff] %v531
      %618 = vst [vmem:[#allocation2 + $0x90] sm:$0xff] %v592
      %619 = vst [vmem:[#allocation2 + $0x98] sm:$0xff] %v594
      %620 = vst [vmem:[#allocation2 + $0xa0] sm:$0xff] %v533
      %621 = vst [vmem:[#allocation2 + $0xa8] sm:$0xff] %v535
      %622 = vst [vmem:[#allocation2 + $0xb0] sm:$0xff] %v596
      %623 = vst [vmem:[#allocation2 + $0xb8] sm:$0xff] %v598
      %s624 = smul.u32 %s20, 3
      %v625 = vld [vmem:[#allocation3] sm:$0xff]
      %v626 = vld [vmem:[#allocation3 + $0x8] sm:$0xff]
      %v627 = vld [vmem:[#allocation4] sm:$0xff]
      %v628 = vld [vmem:[#allocation4 + $0x8] sm:$0xff]
      %s629 = smul.u32 0, 4
      %s630 = smul.addr %s629, 8
      %s631 = scalar_lea.vmem [#allocation2], %s630
      %v632 = vld [vmem:[%s631] sm:$0xff]
      %v633 = vld [vmem:[%s631 + $0x8] sm:$0xff]
      %v634 = vld [vmem:[%s631 + $0x10] sm:$0xff]
      %v635 = vld [vmem:[%s631 + $0x18] sm:$0xff]
      %v636 = vld [vmem:[%s631 + $0x20] sm:$0xff]
      %v637 = vld [vmem:[%s631 + $0x28] sm:$0xff]
      %v638 = vld [vmem:[%s631 + $0x30] sm:$0xff]
      %v639 = vld [vmem:[%s631 + $0x38] sm:$0xff]
      %v640 = vpack.c.bf16 %v626, %v625
      %v641 = vld [vmem:[%s2] sm:$0xff]
      %v642 = vld [vmem:[%s2 + $0x8] sm:$0xff]
      %v643 = vld [vmem:[%s2 + $0x10] sm:$0xff]
      %v644 = vld [vmem:[%s2 + $0x18] sm:$0xff]
      %v645 = vld [vmem:[%s2 + $0x20] sm:$0xff]
      %v646 = vld [vmem:[%s2 + $0x28] sm:$0xff]
      %v647 = vld [vmem:[%s2 + $0x30] sm:$0xff]
      %v648 = vld [vmem:[%s2 + $0x38] sm:$0xff]
      %v649 = vld [vmem:[%s2 + $0x40] sm:$0xff]
      %v650 = vld [vmem:[%s2 + $0x48] sm:$0xff]
      %v651 = vld [vmem:[%s2 + $0x50] sm:$0xff]
      %v652 = vld [vmem:[%s2 + $0x58] sm:$0xff]
      %v653 = vld [vmem:[%s2 + $0x60] sm:$0xff]
      %v654 = vld [vmem:[%s2 + $0x68] sm:$0xff]
      %v655 = vld [vmem:[%s2 + $0x70] sm:$0xff]
      %v656 = vld [vmem:[%s2 + $0x78] sm:$0xff]
      %v657 = vld [vmem:[%s2 + $0x80] sm:$0xff]
      %v658 = vld [vmem:[%s2 + $0x88] sm:$0xff]
      %v659 = vld [vmem:[%s2 + $0x90] sm:$0xff]
      %v660 = vld [vmem:[%s2 + $0x98] sm:$0xff]
      %v661 = vld [vmem:[%s2 + $0xa0] sm:$0xff]
      %v662 = vld [vmem:[%s2 + $0xa8] sm:$0xff]
      %v663 = vld [vmem:[%s2 + $0xb0] sm:$0xff]
      %v664 = vld [vmem:[%s2 + $0xb8] sm:$0xff]
      %v665 = vld [vmem:[%s2 + $0xc0] sm:$0xff]
      %v666 = vld [vmem:[%s2 + $0xc8] sm:$0xff]
      %v667 = vld [vmem:[%s2 + $0xd0] sm:$0xff]
      %v668 = vld [vmem:[%s2 + $0xd8] sm:$0xff]
      %v669 = vld [vmem:[%s2 + $0xe0] sm:$0xff]
      %v670 = vld [vmem:[%s2 + $0xe8] sm:$0xff]
      %v671 = vld [vmem:[%s2 + $0xf0] sm:$0xff]
      %v672 = vld [vmem:[%s2 + $0xf8] sm:$0xff]
      %v705 = vunpack.c.l.b16 %v641
      %v706 = vunpack.c.h.b16 %v641
      %v707 = vunpack.c.l.b16 %v642
      %v708 = vunpack.c.h.b16 %v642
      %v709 = vunpack.c.l.b16 %v643
      %v710 = vunpack.c.h.b16 %v643
      %v711 = vunpack.c.l.b16 %v644
      %v712 = vunpack.c.h.b16 %v644
      %v713 = vunpack.c.l.b16 %v645
      %v714 = vunpack.c.h.b16 %v645
      %v715 = vunpack.c.l.b16 %v646
      %v716 = vunpack.c.h.b16 %v646
      %v717 = vunpack.c.l.b16 %v647
      %v718 = vunpack.c.h.b16 %v647
      %v719 = vunpack.c.l.b16 %v648
      %v720 = vunpack.c.h.b16 %v648
      %v721 = vunpack.c.l.b16 %v649
      %v722 = vunpack.c.h.b16 %v649
      %v723 = vunpack.c.l.b16 %v650
      %v724 = vunpack.c.h.b16 %v650
      %v725 = vunpack.c.l.b16 %v651
      %v726 = vunpack.c.h.b16 %v651
      %v727 = vunpack.c.l.b16 %v652
      %v728 = vunpack.c.h.b16 %v652
      %v729 = vunpack.c.l.b16 %v653
      %v730 = vunpack.c.h.b16 %v653
      %v731 = vunpack.c.l.b16 %v654
      %v732 = vunpack.c.h.b16 %v654
      %v733 = vunpack.c.l.b16 %v655
      %v734 = vunpack.c.h.b16 %v655
      %v735 = vunpack.c.l.b16 %v656
      %v736 = vunpack.c.h.b16 %v656
      %v737 = vunpack.c.l.b16 %v657
      %v738 = vunpack.c.h.b16 %v657
      %v739 = vunpack.c.l.b16 %v658
      %v740 = vunpack.c.h.b16 %v658
      %v741 = vunpack.c.l.b16 %v659
      %v742 = vunpack.c.h.b16 %v659
      %v743 = vunpack.c.l.b16 %v660
      %v744 = vunpack.c.h.b16 %v660
      %v745 = vunpack.c.l.b16 %v661
      %v746 = vunpack.c.h.b16 %v661
      %v747 = vunpack.c.l.b16 %v662
      %v748 = vunpack.c.h.b16 %v662
      %v749 = vunpack.c.l.b16 %v663
      %v750 = vunpack.c.h.b16 %v663
      %v751 = vunpack.c.l.b16 %v664
      %v752 = vunpack.c.h.b16 %v664
      %v753 = vunpack.c.l.b16 %v665
      %v754 = vunpack.c.h.b16 %v665
      %v755 = vunpack.c.l.b16 %v666
      %v756 = vunpack.c.h.b16 %v666
      %v757 = vunpack.c.l.b16 %v667
      %v758 = vunpack.c.h.b16 %v667
      %v759 = vunpack.c.l.b16 %v668
      %v760 = vunpack.c.h.b16 %v668
      %v761 = vunpack.c.l.b16 %v669
      %v762 = vunpack.c.h.b16 %v669
      %v763 = vunpack.c.l.b16 %v670
      %v764 = vunpack.c.h.b16 %v670
      %v765 = vunpack.c.l.b16 %v671
      %v766 = vunpack.c.h.b16 %v671
      %v767 = vunpack.c.l.b16 %v672
      %v768 = vunpack.c.h.b16 %v672
      %v769 = vpack.c.b16 %v709, %v705
      %v770 = vpack.c.b16 %v710, %v706
      %v771 = vpack.c.b16 %v711, %v707
      %v772 = vpack.c.b16 %v712, %v708
      %v773 = vpack.c.b16 %v717, %v713
      %v774 = vpack.c.b16 %v718, %v714
      %v775 = vpack.c.b16 %v719, %v715
      %v776 = vpack.c.b16 %v720, %v716
      %v777 = vpack.c.b16 %v725, %v721
      %v778 = vpack.c.b16 %v726, %v722
      %v779 = vpack.c.b16 %v727, %v723
      %v780 = vpack.c.b16 %v728, %v724
      %v781 = vpack.c.b16 %v733, %v729
      %v782 = vpack.c.b16 %v734, %v730
      %v783 = vpack.c.b16 %v735, %v731
      %v784 = vpack.c.b16 %v736, %v732
      %v785 = vpack.c.b16 %v741, %v737
      %v786 = vpack.c.b16 %v742, %v738
      %v787 = vpack.c.b16 %v743, %v739
      %v788 = vpack.c.b16 %v744, %v740
      %v789 = vpack.c.b16 %v749, %v745
      %v790 = vpack.c.b16 %v750, %v746
      %v791 = vpack.c.b16 %v751, %v747
      %v792 = vpack.c.b16 %v752, %v748
      %v793 = vpack.c.b16 %v757, %v753
      %v794 = vpack.c.b16 %v758, %v754
      %v795 = vpack.c.b16 %v759, %v755
      %v796 = vpack.c.b16 %v760, %v756
      %v797 = vpack.c.b16 %v765, %v761
      %v798 = vpack.c.b16 %v766, %v762
      %v799 = vpack.c.b16 %v767, %v763
      %v800 = vpack.c.b16 %v768, %v764
      %833 = vmatprep.subr.bf16.mxu0 %v770
      %834 = vmatpush1.bf16.msra.mxu0 %v769
      %835 = vmatprep.subr.bf16.mxu0 %v774
      %836 = vmatpush1.bf16.msra.mxu0 %v773
      %837 = vmatprep.subr.bf16.mxu0 %v778
      %838 = vmatpush1.bf16.msra.mxu0 %v777
      %839 = vmatprep.subr.bf16.mxu0 %v782
      %840 = vmatpush1.bf16.msra.mxu0 %v781
      %841 = vmatprep.subr.bf16.mxu0 %v786
      %842 = vmatpush1.bf16.msra.mxu0 %v785
      %843 = vmatprep.subr.bf16.mxu0 %v790
      %844 = vmatpush1.bf16.msra.mxu0 %v789
      %845 = vmatprep.subr.bf16.mxu0 %v794
      %846 = vmatpush1.bf16.msra.mxu0 %v793
      %847 = vmatprep.subr.bf16.mxu0 %v798
      %848 = vmatpush1.bf16.msra.mxu0 %v797
      %849 = vmatprep.subr.bf16.mxu0 0
      %850 = vmatpush1.bf16.msra.mxu0 0
      %851 = vmatprep.subr.bf16.mxu0 0
      %852 = vmatpush1.bf16.msra.mxu0 0
      %853 = vmatprep.subr.bf16.mxu0 0
      %854 = vmatpush1.bf16.msra.mxu0 0
      %855 = vmatprep.subr.bf16.mxu0 0
      %856 = vmatpush1.bf16.msra.mxu0 0
      %857 = vmatprep.subr.bf16.mxu0 0
      %858 = vmatpush1.bf16.msra.mxu0 0
      %859 = vmatprep.subr.bf16.mxu0 0
      %860 = vmatpush1.bf16.msra.mxu0 0
      %861 = vmatprep.subr.bf16.mxu0 0
      %862 = vmatpush1.bf16.msra.mxu0 0
      %863 = vmatprep.subr.bf16.mxu0 0
      %864 = vmatpush1.bf16.msra.mxu0 0
      %865 = vmatprep.mubr.bf16.mxu0 0
      %866 = vmatmul.mubr.bf16.gmra.mrb[0].mxu0 %v640
      %v867 = vpop.f32.mrb[0].mxu0
      %v868 = vadd.f32 0.0, %v867
      %v869 = vpop.f32.mrb[0].mxu0
      %v870 = vadd.f32 0.0, %v869
      %v871 = vpop.f32.mrb[0].mxu0
      %v872 = vadd.f32 0.0, %v871
      %v873 = vpop.f32.mrb[0].mxu0
      %v874 = vadd.f32 0.0, %v873
      %875 = vdwg.mxu0
      %876 = vmatprep.subr.bf16.mxu0 %v772
      %877 = vmatpush1.bf16.msra.mxu0 %v771
      %878 = vmatprep.subr.bf16.mxu0 %v776
      %879 = vmatpush1.bf16.msra.mxu0 %v775
      %880 = vmatprep.subr.bf16.mxu0 %v780
      %881 = vmatpush1.bf16.msra.mxu0 %v779
      %882 = vmatprep.subr.bf16.mxu0 %v784
      %883 = vmatpush1.bf16.msra.mxu0 %v783
      %884 = vmatprep.subr.bf16.mxu0 %v788
      %885 = vmatpush1.bf16.msra.mxu0 %v787
      %886 = vmatprep.subr.bf16.mxu0 %v792
      %887 = vmatpush1.bf16.msra.mxu0 %v791
      %888 = vmatprep.subr.bf16.mxu0 %v796
      %889 = vmatpush1.bf16.msra.mxu0 %v795
      %890 = vmatprep.subr.bf16.mxu0 %v800
      %891 = vmatpush1.bf16.msra.mxu0 %v799
      %892 = vmatprep.subr.bf16.mxu0 0
      %893 = vmatpush1.bf16.msra.mxu0 0
      %894 = vmatprep.subr.bf16.mxu0 0
      %895 = vmatpush1.bf16.msra.mxu0 0
      %896 = vmatprep.subr.bf16.mxu0 0
      %897 = vmatpush1.bf16.msra.mxu0 0
      %898 = vmatprep.subr.bf16.mxu0 0
      %899 = vmatpush1.bf16.msra.mxu0 0
      %900 = vmatprep.subr.bf16.mxu0 0
      %901 = vmatpush1.bf16.msra.mxu0 0
      %902 = vmatprep.subr.bf16.mxu0 0
      %903 = vmatpush1.bf16.msra.mxu0 0
      %904 = vmatprep.subr.bf16.mxu0 0
      %905 = vmatpush1.bf16.msra.mxu0 0
      %906 = vmatprep.subr.bf16.mxu0 0
      %907 = vmatpush1.bf16.msra.mxu0 0
      %908 = vmatprep.mubr.bf16.mxu0 0
      %909 = vmatmul.mubr.bf16.gmra.mrb[0].mxu0 %v640
      %v910 = vpop.f32.mrb[0].mxu0
      %v911 = vadd.f32 0.0, %v910
      %v912 = vpop.f32.mrb[0].mxu0
      %v913 = vadd.f32 0.0, %v912
      %v914 = vpop.f32.mrb[0].mxu0
      %v915 = vadd.f32 0.0, %v914
      %v916 = vpop.f32.mrb[0].mxu0
      %v917 = vadd.f32 0.0, %v916
      %918 = vdwg.mxu0
      %v919 = vadd.f32 %v632, %v868
      %v920 = vadd.f32 %v633, %v870
      %v921 = vadd.f32 %v634, %v911
      %v922 = vadd.f32 %v635, %v913
      %v923 = vadd.f32 %v636, %v872
      %v924 = vadd.f32 %v637, %v874
      %v925 = vadd.f32 %v638, %v915
      %v926 = vadd.f32 %v639, %v917
      %v927 = vxor.u32 %v919, 2147483648
      %v928 = vxor.u32 %v923, 2147483648
      %v929 = vmul.f32 %v927, 1.442695
      %v930 = vpow.pop %v929
      %v931 = vmul.f32 %v928, 1.442695
      %v932 = vpow.pop %v931
      %v933 = vadd.f32 %v930, 1.0
      %v934 = vadd.f32 %v932, 1.0
      %v935 = vrcp.pop %v933
      %v936 = vmul.f32 1.0, %v935
      %v937 = vrcp.pop %v934
      %v938 = vmul.f32 1.0, %v937
      %v939 = vxor.u32 %v920, 2147483648
      %v940 = vxor.u32 %v924, 2147483648
      %v941 = vmul.f32 %v939, 1.442695
      %v942 = vpow.pop %v941
      %v943 = vmul.f32 %v940, 1.442695
      %v944 = vpow.pop %v943
      %v945 = vadd.f32 %v942, 1.0
      %v946 = vadd.f32 %v944, 1.0
      %v947 = vrcp.pop %v945
      %v948 = vmul.f32 1.0, %v947
      %v949 = vrcp.pop %v946
      %v950 = vmul.f32 1.0, %v949
      %v951 = vtanh.pop %v921
      %v952 = vtanh.pop %v925
      %v953 = vxor.u32 %v922, 2147483648
      %v954 = vxor.u32 %v926, 2147483648
      %v955 = vmul.f32 %v953, 1.442695
      %v956 = vpow.pop %v955
      %v957 = vmul.f32 %v954, 1.442695
      %v958 = vpow.pop %v957
      %v959 = vadd.f32 %v956, 1.0
      %v960 = vadd.f32 %v958, 1.0
      %v961 = vrcp.pop %v959
      %v962 = vmul.f32 1.0, %v961
      %v963 = vrcp.pop %v960
      %v964 = vmul.f32 1.0, %v963
      %v965 = vmul.f32 %v948, %v627
      %v966 = vmul.f32 %v950, %v628
      %v967 = vmul.f32 %v936, %v951
      %v968 = vmul.f32 %v938, %v952
      %v969 = vadd.f32 %v965, %v967
      %v970 = vadd.f32 %v966, %v968
      %v971 = vtanh.pop %v969
      %v972 = vtanh.pop %v970
      %v973 = vmul.f32 %v962, %v971
      %v974 = vmul.f32 %v964, %v972
      %p975 = scmp.lt.s32.totalorder %s624, 8
      %s976 = scalar_select %p975, 1, 0
      %v977 = vstv %s976
      %vm978 = vcmp.eq.s32.totalorder %v977, 1
      %v979 = vsel %vm978, %v973, %v625
      %v980 = vsel %vm978, %v974, %v626
      %v981 = vsel %vm978, %v969, %v627
      %v982 = vsel %vm978, %v970, %v628
      %s983 = smul.u32 2, 4
      %s984 = smul.addr %s983, 8
      %s985 = scalar_lea.vmem [#allocation2], %s984
      %v986 = vld [vmem:[%s985] sm:$0xff]
      %v987 = vld [vmem:[%s985 + $0x8] sm:$0xff]
      %v988 = vld [vmem:[%s985 + $0x10] sm:$0xff]
      %v989 = vld [vmem:[%s985 + $0x18] sm:$0xff]
      %v990 = vld [vmem:[%s985 + $0x20] sm:$0xff]
      %v991 = vld [vmem:[%s985 + $0x28] sm:$0xff]
      %v992 = vld [vmem:[%s985 + $0x30] sm:$0xff]
      %v993 = vld [vmem:[%s985 + $0x38] sm:$0xff]
      %v994 = vpack.c.bf16 %v980, %v979
      %995 = vmatprep.subr.bf16.mxu0 %v770
      %996 = vmatpush1.bf16.msra.mxu0 %v769
      %997 = vmatprep.subr.bf16.mxu0 %v774
      %998 = vmatpush1.bf16.msra.mxu0 %v773
      %999 = vmatprep.subr.bf16.mxu0 %v778
      %1000 = vmatpush1.bf16.msra.mxu0 %v777
      %1001 = vmatprep.subr.bf16.mxu0 %v782
      %1002 = vmatpush1.bf16.msra.mxu0 %v781
      %1003 = vmatprep.subr.bf16.mxu0 %v786
      %1004 = vmatpush1.bf16.msra.mxu0 %v785
      %1005 = vmatprep.subr.bf16.mxu0 %v790
      %1006 = vmatpush1.bf16.msra.mxu0 %v789
      %1007 = vmatprep.subr.bf16.mxu0 %v794
      %1008 = vmatpush1.bf16.msra.mxu0 %v793
      %1009 = vmatprep.subr.bf16.mxu0 %v798
      %1010 = vmatpush1.bf16.msra.mxu0 %v797
      %1011 = vmatprep.subr.bf16.mxu0 0
      %1012 = vmatpush1.bf16.msra.mxu0 0
      %1013 = vmatprep.subr.bf16.mxu0 0
      %1014 = vmatpush1.bf16.msra.mxu0 0
      %1015 = vmatprep.subr.bf16.mxu0 0
      %1016 = vmatpush1.bf16.msra.mxu0 0
      %1017 = vmatprep.subr.bf16.mxu0 0
      %1018 = vmatpush1.bf16.msra.mxu0 0
      %1019 = vmatprep.subr.bf16.mxu0 0
      %1020 = vmatpush1.bf16.msra.mxu0 0
      %1021 = vmatprep.subr.bf16.mxu0 0
      %1022 = vmatpush1.bf16.msra.mxu0 0
      %1023 = vmatprep.subr.bf16.mxu0 0
      %1024 = vmatpush1.bf16.msra.mxu0 0
      %1025 = vmatprep.subr.bf16.mxu0 0
      %1026 = vmatpush1.bf16.msra.mxu0 0
      %1027 = vmatprep.mubr.bf16.mxu0 0
      %1028 = vmatmul.mubr.bf16.gmra.mrb[0].mxu0 %v994
      %v1029 = vpop.f32.mrb[0].mxu0
      %v1030 = vadd.f32 0.0, %v1029
      %v1031 = vpop.f32.mrb[0].mxu0
      %v1032 = vadd.f32 0.0, %v1031
      %v1033 = vpop.f32.mrb[0].mxu0
      %v1034 = vadd.f32 0.0, %v1033
      %v1035 = vpop.f32.mrb[0].mxu0
      %v1036 = vadd.f32 0.0, %v1035
      %1037 = vdwg.mxu0
      %1038 = vmatprep.subr.bf16.mxu0 %v772
      %1039 = vmatpush1.bf16.msra.mxu0 %v771
      %1040 = vmatprep.subr.bf16.mxu0 %v776
      %1041 = vmatpush1.bf16.msra.mxu0 %v775
      %1042 = vmatprep.subr.bf16.mxu0 %v780
      %1043 = vmatpush1.bf16.msra.mxu0 %v779
      %1044 = vmatprep.subr.bf16.mxu0 %v784
      %1045 = vmatpush1.bf16.msra.mxu0 %v783
      %1046 = vmatprep.subr.bf16.mxu0 %v788
      %1047 = vmatpush1.bf16.msra.mxu0 %v787
      %1048 = vmatprep.subr.bf16.mxu0 %v792
      %1049 = vmatpush1.bf16.msra.mxu0 %v791
      %1050 = vmatprep.subr.bf16.mxu0 %v796
      %1051 = vmatpush1.bf16.msra.mxu0 %v795
      %1052 = vmatprep.subr.bf16.mxu0 %v800
      %1053 = vmatpush1.bf16.msra.mxu0 %v799
      %1054 = vmatprep.subr.bf16.mxu0 0
      %1055 = vmatpush1.bf16.msra.mxu0 0
      %1056 = vmatprep.subr.bf16.mxu0 0
      %1057 = vmatpush1.bf16.msra.mxu0 0
      %1058 = vmatprep.subr.bf16.mxu0 0
      %1059 = vmatpush1.bf16.msra.mxu0 0
      %1060 = vmatprep.subr.bf16.mxu0 0
      %1061 = vmatpush1.bf16.msra.mxu0 0
      %1062 = vmatprep.subr.bf16.mxu0 0
      %1063 = vmatpush1.bf16.msra.mxu0 0
      %1064 = vmatprep.subr.bf16.mxu0 0
      %1065 = vmatpush1.bf16.msra.mxu0 0
      %1066 = vmatprep.subr.bf16.mxu0 0
      %1067 = vmatpush1.bf16.msra.mxu0 0
      %1068 = vmatprep.subr.bf16.mxu0 0
      %1069 = vmatpush1.bf16.msra.mxu0 0
      %1070 = vmatprep.mubr.bf16.mxu0 0
      %1071 = vmatmul.mubr.bf16.gmra.mrb[0].mxu0 %v994
      %v1072 = vpop.f32.mrb[0].mxu0
      %v1073 = vadd.f32 0.0, %v1072
      %v1074 = vpop.f32.mrb[0].mxu0
      %v1075 = vadd.f32 0.0, %v1074
      %v1076 = vpop.f32.mrb[0].mxu0
      %v1077 = vadd.f32 0.0, %v1076
      %v1078 = vpop.f32.mrb[0].mxu0
      %v1079 = vadd.f32 0.0, %v1078
      %1080 = vdwg.mxu0
      %v1081 = vadd.f32 %v986, %v1030
      %v1082 = vadd.f32 %v987, %v1032
      %v1083 = vadd.f32 %v988, %v1073
      %v1084 = vadd.f32 %v989, %v1075
      %v1085 = vadd.f32 %v990, %v1034
      %v1086 = vadd.f32 %v991, %v1036
      %v1087 = vadd.f32 %v992, %v1077
      %v1088 = vadd.f32 %v993, %v1079
      %v1089 = vxor.u32 %v1081, 2147483648
      %v1090 = vxor.u32 %v1085, 2147483648
      %v1091 = vmul.f32 %v1089, 1.442695
      %v1092 = vpow.pop %v1091
      %v1093 = vmul.f32 %v1090, 1.442695
      %v1094 = vpow.pop %v1093
      %v1095 = vadd.f32 %v1092, 1.0
      %v1096 = vadd.f32 %v1094, 1.0
      %v1097 = vrcp.pop %v1095
      %v1098 = vmul.f32 1.0, %v1097
      %v1099 = vrcp.pop %v1096
      %v1100 = vmul.f32 1.0, %v1099
      %v1101 = vxor.u32 %v1082, 2147483648
      %v1102 = vxor.u32 %v1086, 2147483648
      %v1103 = vmul.f32 %v1101, 1.442695
      %v1104 = vpow.pop %v1103
      %v1105 = vmul.f32 %v1102, 1.442695
      %v1106 = vpow.pop %v1105
      %v1107 = vadd.f32 %v1104, 1.0
      %v1108 = vadd.f32 %v1106, 1.0
      %v1109 = vrcp.pop %v1107
      %v1110 = vmul.f32 1.0, %v1109
      %v1111 = vrcp.pop %v1108
      %v1112 = vmul.f32 1.0, %v1111
      %v1113 = vtanh.pop %v1083
      %v1114 = vtanh.pop %v1087
      %v1115 = vxor.u32 %v1084, 2147483648
      %v1116 = vxor.u32 %v1088, 2147483648
      %v1117 = vmul.f32 %v1115, 1.442695
      %v1118 = vpow.pop %v1117
      %v1119 = vmul.f32 %v1116, 1.442695
      %v1120 = vpow.pop %v1119
      %v1121 = vadd.f32 %v1118, 1.0
      %v1122 = vadd.f32 %v1120, 1.0
      %v1123 = vrcp.pop %v1121
      %v1124 = vmul.f32 1.0, %v1123
      %v1125 = vrcp.pop %v1122
      %v1126 = vmul.f32 1.0, %v1125
      %v1127 = vmul.f32 %v1110, %v981
      %v1128 = vmul.f32 %v1112, %v982
      %v1129 = vmul.f32 %v1098, %v1113
      %v1130 = vmul.f32 %v1100, %v1114
      %v1131 = vadd.f32 %v1127, %v1129
      %v1132 = vadd.f32 %v1128, %v1130
      %v1133 = vtanh.pop %v1131
      %v1134 = vtanh.pop %v1132
      %v1135 = vmul.f32 %v1124, %v1133
      %v1136 = vmul.f32 %v1126, %v1134
      %s1137 = sadd.s32 %s624, 1
      %p1138 = scmp.lt.s32.totalorder %s1137, 8
      %s1139 = scalar_select %p1138, 1, 0
      %v1140 = vstv %s1139
      %vm1141 = vcmp.eq.s32.totalorder %v1140, 1
      %v1142 = vsel %vm1141, %v1135, %v979
      %v1143 = vsel %vm1141, %v1136, %v980
      %v1144 = vsel %vm1141, %v1131, %v981
      %v1145 = vsel %vm1141, %v1132, %v982
      %s1146 = smul.u32 4, 4
      %s1147 = smul.addr %s1146, 8
      %s1148 = scalar_lea.vmem [#allocation2], %s1147
      %v1149 = vld [vmem:[%s1148] sm:$0xff]
      %v1150 = vld [vmem:[%s1148 + $0x8] sm:$0xff]
      %v1151 = vld [vmem:[%s1148 + $0x10] sm:$0xff]
      %v1152 = vld [vmem:[%s1148 + $0x18] sm:$0xff]
      %v1153 = vld [vmem:[%s1148 + $0x20] sm:$0xff]
      %v1154 = vld [vmem:[%s1148 + $0x28] sm:$0xff]
      %v1155 = vld [vmem:[%s1148 + $0x30] sm:$0xff]
      %v1156 = vld [vmem:[%s1148 + $0x38] sm:$0xff]
      %v1157 = vpack.c.bf16 %v1143, %v1142
      %1158 = vmatprep.subr.bf16.mxu0 %v770
      %1159 = vmatpush1.bf16.msra.mxu0 %v769
      %1160 = vmatprep.subr.bf16.mxu0 %v774
      %1161 = vmatpush1.bf16.msra.mxu0 %v773
      %1162 = vmatprep.subr.bf16.mxu0 %v778
      %1163 = vmatpush1.bf16.msra.mxu0 %v777
      %1164 = vmatprep.subr.bf16.mxu0 %v782
      %1165 = vmatpush1.bf16.msra.mxu0 %v781
      %1166 = vmatprep.subr.bf16.mxu0 %v786
      %1167 = vmatpush1.bf16.msra.mxu0 %v785
      %1168 = vmatprep.subr.bf16.mxu0 %v790
      %1169 = vmatpush1.bf16.msra.mxu0 %v789
      %1170 = vmatprep.subr.bf16.mxu0 %v794
      %1171 = vmatpush1.bf16.msra.mxu0 %v793
      %1172 = vmatprep.subr.bf16.mxu0 %v798
      %1173 = vmatpush1.bf16.msra.mxu0 %v797
      %1174 = vmatprep.subr.bf16.mxu0 0
      %1175 = vmatpush1.bf16.msra.mxu0 0
      %1176 = vmatprep.subr.bf16.mxu0 0
      %1177 = vmatpush1.bf16.msra.mxu0 0
      %1178 = vmatprep.subr.bf16.mxu0 0
      %1179 = vmatpush1.bf16.msra.mxu0 0
      %1180 = vmatprep.subr.bf16.mxu0 0
      %1181 = vmatpush1.bf16.msra.mxu0 0
      %1182 = vmatprep.subr.bf16.mxu0 0
      %1183 = vmatpush1.bf16.msra.mxu0 0
      %1184 = vmatprep.subr.bf16.mxu0 0
      %1185 = vmatpush1.bf16.msra.mxu0 0
      %1186 = vmatprep.subr.bf16.mxu0 0
      %1187 = vmatpush1.bf16.msra.mxu0 0
      %1188 = vmatprep.subr.bf16.mxu0 0
      %1189 = vmatpush1.bf16.msra.mxu0 0
      %1190 = vmatprep.mubr.bf16.mxu0 0
      %1191 = vmatmul.mubr.bf16.gmra.mrb[0].mxu0 %v1157
      %v1192 = vpop.f32.mrb[0].mxu0
      %v1193 = vadd.f32 0.0, %v1192
      %v1194 = vpop.f32.mrb[0].mxu0
      %v1195 = vadd.f32 0.0, %v1194
      %v1196 = vpop.f32.mrb[0].mxu0
      %v1197 = vadd.f32 0.0, %v1196
      %v1198 = vpop.f32.mrb[0].mxu0
      %v1199 = vadd.f32 0.0, %v1198
      %1200 = vdwg.mxu0
      %1201 = vmatprep.subr.bf16.mxu0 %v772
      %1202 = vmatpush1.bf16.msra.mxu0 %v771
      %1203 = vmatprep.subr.bf16.mxu0 %v776
      %1204 = vmatpush1.bf16.msra.mxu0 %v775
      %1205 = vmatprep.subr.bf16.mxu0 %v780
      %1206 = vmatpush1.bf16.msra.mxu0 %v779
      %1207 = vmatprep.subr.bf16.mxu0 %v784
      %1208 = vmatpush1.bf16.msra.mxu0 %v783
      %1209 = vmatprep.subr.bf16.mxu0 %v788
      %1210 = vmatpush1.bf16.msra.mxu0 %v787
      %1211 = vmatprep.subr.bf16.mxu0 %v792
      %1212 = vmatpush1.bf16.msra.mxu0 %v791
      %1213 = vmatprep.subr.bf16.mxu0 %v796
      %1214 = vmatpush1.bf16.msra.mxu0 %v795
      %1215 = vmatprep.subr.bf16.mxu0 %v800
      %1216 = vmatpush1.bf16.msra.mxu0 %v799
      %1217 = vmatprep.subr.bf16.mxu0 0
      %1218 = vmatpush1.bf16.msra.mxu0 0
      %1219 = vmatprep.subr.bf16.mxu0 0
      %1220 = vmatpush1.bf16.msra.mxu0 0
      %1221 = vmatprep.subr.bf16.mxu0 0
      %1222 = vmatpush1.bf16.msra.mxu0 0
      %1223 = vmatprep.subr.bf16.mxu0 0
      %1224 = vmatpush1.bf16.msra.mxu0 0
      %1225 = vmatprep.subr.bf16.mxu0 0
      %1226 = vmatpush1.bf16.msra.mxu0 0
      %1227 = vmatprep.subr.bf16.mxu0 0
      %1228 = vmatpush1.bf16.msra.mxu0 0
      %1229 = vmatprep.subr.bf16.mxu0 0
      %1230 = vmatpush1.bf16.msra.mxu0 0
      %1231 = vmatprep.subr.bf16.mxu0 0
      %1232 = vmatpush1.bf16.msra.mxu0 0
      %1233 = vmatprep.mubr.bf16.mxu0 0
      %1234 = vmatmul.mubr.bf16.gmra.mrb[0].mxu0 %v1157
      %v1235 = vpop.f32.mrb[0].mxu0
      %v1236 = vadd.f32 0.0, %v1235
      %v1237 = vpop.f32.mrb[0].mxu0
      %v1238 = vadd.f32 0.0, %v1237
      %v1239 = vpop.f32.mrb[0].mxu0
      %v1240 = vadd.f32 0.0, %v1239
      %v1241 = vpop.f32.mrb[0].mxu0
      %v1242 = vadd.f32 0.0, %v1241
      %1243 = vdwg.mxu0
      %v1244 = vadd.f32 %v1149, %v1193
      %v1245 = vadd.f32 %v1150, %v1195
      %v1246 = vadd.f32 %v1151, %v1236
      %v1247 = vadd.f32 %v1152, %v1238
      %v1248 = vadd.f32 %v1153, %v1197
      %v1249 = vadd.f32 %v1154, %v1199
      %v1250 = vadd.f32 %v1155, %v1240
      %v1251 = vadd.f32 %v1156, %v1242
      %v1252 = vxor.u32 %v1244, 2147483648
      %v1253 = vxor.u32 %v1248, 2147483648
      %v1254 = vmul.f32 %v1252, 1.442695
      %v1255 = vpow.pop %v1254
      %v1256 = vmul.f32 %v1253, 1.442695
      %v1257 = vpow.pop %v1256
      %v1258 = vadd.f32 %v1255, 1.0
      %v1259 = vadd.f32 %v1257, 1.0
      %v1260 = vrcp.pop %v1258
      %v1261 = vmul.f32 1.0, %v1260
      %v1262 = vrcp.pop %v1259
      %v1263 = vmul.f32 1.0, %v1262
      %v1264 = vxor.u32 %v1245, 2147483648
      %v1265 = vxor.u32 %v1249, 2147483648
      %v1266 = vmul.f32 %v1264, 1.442695
      %v1267 = vpow.pop %v1266
      %v1268 = vmul.f32 %v1265, 1.442695
      %v1269 = vpow.pop %v1268
      %v1270 = vadd.f32 %v1267, 1.0
      %v1271 = vadd.f32 %v1269, 1.0
      %v1272 = vrcp.pop %v1270
      %v1273 = vmul.f32 1.0, %v1272
      %v1274 = vrcp.pop %v1271
      %v1275 = vmul.f32 1.0, %v1274
      %v1276 = vtanh.pop %v1246
      %v1277 = vtanh.pop %v1250
      %v1278 = vxor.u32 %v1247, 2147483648
      %v1279 = vxor.u32 %v1251, 2147483648
      %v1280 = vmul.f32 %v1278, 1.442695
      %v1281 = vpow.pop %v1280
      %v1282 = vmul.f32 %v1279, 1.442695
      %v1283 = vpow.pop %v1282
      %v1284 = vadd.f32 %v1281, 1.0
      %v1285 = vadd.f32 %v1283, 1.0
      %v1286 = vrcp.pop %v1284
      %v1287 = vmul.f32 1.0, %v1286
      %v1288 = vrcp.pop %v1285
      %v1289 = vmul.f32 1.0, %v1288
      %v1290 = vmul.f32 %v1273, %v1144
      %v1291 = vmul.f32 %v1275, %v1145
      %v1292 = vmul.f32 %v1261, %v1276
      %v1293 = vmul.f32 %v1263, %v1277
      %v1294 = vadd.f32 %v1290, %v1292
      %v1295 = vadd.f32 %v1291, %v1293
      %v1296 = vtanh.pop %v1294
      %v1297 = vtanh.pop %v1295
      %v1298 = vmul.f32 %v1287, %v1296
      %v1299 = vmul.f32 %v1289, %v1297
      %s1300 = sadd.s32 %s624, 2
      %p1301 = scmp.lt.s32.totalorder %s1300, 8
      %s1302 = scalar_select %p1301, 1, 0
      %v1303 = vstv %s1302
      %vm1304 = vcmp.eq.s32.totalorder %v1303, 1
      %v1305 = vsel %vm1304, %v1298, %v1142
      %v1306 = vsel %vm1304, %v1299, %v1143
      %v1307 = vsel %vm1304, %v1294, %v1144
      %v1308 = vsel %vm1304, %v1295, %v1145
      %1309 = vst [vmem:[#allocation3] sm:$0xff] %v1305
      %1310 = vst [vmem:[#allocation3 + $0x8] sm:$0xff] %v1306
      %1311 = vst [vmem:[#allocation4] sm:$0xff] %v1307
      %1312 = vst [vmem:[#allocation4 + $0x8] sm:$0xff] %v1308
      %p1313 = scmp.eq.s32.totalorder %s20, 2
      // Predicated region
      $region41: #{qa_model_forward.2} parent=35 // pred_check
        %p1314 = pneg %p1313
      $region42: #{qa_model_forward.2} parent=35 // pred_check_branch
        %1316 = sbr.rel (%p1314) target = $region44
      $region43: #{qa_model_forward.2} parent=35 // pred_region
        %1317 = vst [vmem:[%s225] sm:$0xff] %v1305
        %1318 = vst [vmem:[%s225 + $0x8] sm:$0xff] %v1306
      $region44: #{qa_model_forward.2} parent=35 // pred_fallthru
        _
      %s1319 = smul.u32 2, %s19
      %p1320 = scmp.lt.s32.totalorder %s1319, 1
      %s1321 = scalar_select %p1320, %s1319, 1
      %s1322 = smul.addr %s1321, 8
      %s1323 = scalar_lea.vmem %s4, %s1322
      // Predicated region
      $region45: #{qa_model_forward.2} parent=35 // pred_check
        %p1324 = pneg %p138
      $region46: #{qa_model_forward.2} parent=35 // pred_check_branch
        %1326 = sbr.rel (%p1324) target = $region48
      $region47: #{qa_model_forward.2} parent=35 // pred_region
        %s1327 = smul.u32 2, %s19
      $region48: #{qa_model_forward.2} parent=35 // pred_fallthru
        _
      // Predicated region
      $region49: #{qa_model_forward.2} parent=35 // pred_check
        %p1328 = pneg %p138
      $region50: #{qa_model_forward.2} parent=35 // pred_check_branch
        %1330 = sbr.rel (%p1328) target = $region52
      $region51: #{qa_model_forward.2} parent=35 // pred_region
        %s1331 = smul.u32 2, %s19
        %p1332 = scmp.lt.s32.totalorder %s1331, 1
        %s1333 = scalar_select %p1332, %s1331, 1
        %s1334 = smul.addr %s1333, 8
        %s1335 = scalar_lea.vmem %s4, %s1334
      $region52: #{qa_model_forward.2} parent=35 // pred_fallthru
        _
    $region36: #{qa_model_forward.2} parent=5 // pred_fallthru
      _
    %p1336 = scmp.le.s32.totalorder 2, %s10
    // Predicated region
    $region53: #{qa_model_forward.2} parent=5 // pred_check
      %p1337 = pneg %p1336
    $region54: #{qa_model_forward.2} parent=5 // pred_check_branch
      %1339 = sbr.rel (%p1337) target = $region56
    $region55: #{qa_model_forward.2} parent=5 // pred_region
      %s1340 = ssub.s32 %s10, 2
    $region56: #{qa_model_forward.2} parent=5 // pred_fallthru
      _
  $region6: #{qa_model_forward.2} parent=0 // loop_footer
    %s14 = sadd.s32 1, %s10
  $region7: #{qa_model_forward.2} parent=0 // loop_footer_branch
    %9 = sbr.rel target = $region3
  $region8: #{qa_model_forward.2} parent=0 // loop_exit
    _

</llo_original>
